<compile_context>
chip_gen: v6e
topology: v6e:2x2x1
jax: 0.10.0
libtpu: 0.0.40
codegen_flags: <defaults>
</compile_context>

<pallas_src>
import functools

import jax
import jax.numpy as jnp
from jax import lax
from jax.experimental import pallas as pl
from jax.experimental.pallas import tpu as pltpu

LN_EPS = 1e-5


def layernorm_kernel(x_ref, g_ref, b_ref, o_ref, *, inv_n):
    # x_ref / o_ref: (1, C, F, Tt)  -- native layout, T on lanes, F on sublanes
    # g_ref / b_ref: (1, C, F, 1)   -- affine params, lane-broadcast in-kernel
    x = x_ref[...].astype(jnp.float32)

    # ---- mean over the (C, F) plane, independently per lane (per time step) ----
    s = jnp.sum(x, axis=1, keepdims=True)      # C reduce (elementwise adds) -> (1,1,F,Tt)
    s = jnp.sum(s, axis=2, keepdims=True)      # F reduce (sublane, masked)  -> (1,1,1,Tt)
    mean = s * inv_n

    # ---- two-pass variance (numerically stable vs E[x^2] - mean^2) ----
    centered = x - mean                        # mean broadcasts over C and sublanes
    ss = jnp.sum(centered * centered, axis=1, keepdims=True)
    ss = jnp.sum(ss, axis=2, keepdims=True)    # (1, 1, 1, Tt)
    inv_std = lax.rsqrt(ss * inv_n + LN_EPS)

    # gamma/beta: (1, C, F, 1) broadcast along the lane (T) axis.
    g = g_ref[...].astype(jnp.float32)
    b = b_ref[...].astype(jnp.float32)
    o_ref[...] = (centered * inv_std * g + b).astype(o_ref.dtype)


def _pick_t_tile(C, F, T, budget_bytes=24 << 20):
    """T tile: multiple of 128 (lane-dense) sized to a VMEM budget, or full T
    when T < 128 (block dim == full dim is always legal)."""
    if T <= 128:
        return T
    f_pad = ((F + 7) // 8) * 8
    # in + out blocks, double-buffered, f32-equivalent working set
    bytes_per_t = 4 * C * f_pad * 4
    tt = (budget_bytes // bytes_per_t) // 128 * 128
    tt = max(128, min(tt, 512))
    tt = min(tt, (T // 128) * 128)             # partial last block is fine
    return tt


def layer_norm(x, gamma, beta):
    """x: (B, C, F, T); gamma, beta: (C, F).  Returns (B, C, F, T)."""
    B, C, F, T = x.shape
    t_tile = _pick_t_tile(C, F, T)
    grid = (B, pl.cdiv(T, t_tile))

    g = gamma.reshape(1, C, F, 1)
    b = beta.reshape(1, C, F, 1)

    kern = functools.partial(layernorm_kernel, inv_n=1.0 / float(C * F))

    grid_spec = pltpu.PrefetchScalarGridSpec(
        num_scalar_prefetch=0,
        grid=grid,
        in_specs=[
            pl.BlockSpec((1, C, F, t_tile), lambda bi, ti: (bi, 0, 0, ti)),
            pl.BlockSpec((1, C, F, 1), lambda bi, ti: (0, 0, 0, 0)),
            pl.BlockSpec((1, C, F, 1), lambda bi, ti: (0, 0, 0, 0)),
        ],
        out_specs=pl.BlockSpec((1, C, F, t_tile), lambda bi, ti: (bi, 0, 0, ti)),
    )

    return pl.pallas_call(
        kern,
        out_shape=jax.ShapeDtypeStruct((B, C, F, T), x.dtype),
        grid_spec=grid_spec,
        compiler_params=pltpu.CompilerParams(
            dimension_semantics=("parallel", "parallel"),
        ),
    )(x, g, b)


def reference(x, gamma, beta):
    """Pure-JAX reference mirroring the PyTorch LayerNorm module exactly."""
    xp = jnp.transpose(x, (0, 3, 1, 2))                           # (B, T, C, F)
    mean = jnp.mean(xp, axis=(2, 3), keepdims=True)
    var = jnp.mean((xp - mean) ** 2, axis=(2, 3), keepdims=True)
    xln = (xp - mean) / jnp.sqrt(var + LN_EPS) * gamma + beta
    return jnp.transpose(xln, (0, 2, 3, 1))                       # (B, C, F, T)


if __name__ == "__main__":
    # Small shapes consistent with the module (IGCRN uses LayerNorm(c, 257)).
    B, C, F, T = 2, 4, 257, 16
    key = jax.random.PRNGKey(0)
    kx, kg, kb = jax.random.split(key, 3)

    x = jax.random.normal(kx, (B, C, F, T), jnp.float32)
    gamma = 1.0 + 0.1 * jax.random.normal(kg, (C, F), jnp.float32)
    beta = 0.1 * jax.random.normal(kb, (C, F), jnp.float32)

    out = jax.jit(layer_norm)(x, gamma, beta)
    out = jax.block_until_ready(out)

    ref = reference(x, gamma, beta)
    err = float(jnp.max(jnp.abs(out - ref)))
    assert out.shape == (B, C, F, T), out.shape
    assert err < 1e-4, f"max abs err {err}"
    print("KERNEL_OK")
</pallas_src>

<mosaic_0001>
module attributes {stable_mosaic.version = 11 : i64} {
  func.func @layernorm_kernel(%arg0: i32, %arg1: i32, %arg2: memref<1x4x257x16xf32, #tpu.memory_space<vmem>>, %arg3: memref<1x4x257x1xf32, #tpu.memory_space<vmem>>, %arg4: memref<1x4x257x1xf32, #tpu.memory_space<vmem>>, %arg5: memref<1x4x257x16xf32, #tpu.memory_space<vmem>>) attributes {dimension_semantics = [#tpu.dimension_semantics<parallel>, #tpu.dimension_semantics<parallel>], iteration_bounds = array<i64: 2, 1>, scalar_prefetch = 0 : i64, scratch_operands = 0 : i64, tpu.core_type = #tpu.core_type<tc>, window_params = [{transform_indices = @transform_0, window_bounds = array<i64: 1, 4, 257, 16>}, {pipeline_mode = #tpu.pipeline_mode<synchronous>, transform_indices = @transform_1, window_bounds = array<i64: 1, 4, 257, 1>}, {pipeline_mode = #tpu.pipeline_mode<synchronous>, transform_indices = @transform_2, window_bounds = array<i64: 1, 4, 257, 1>}, {transform_indices = @transform_3, window_bounds = array<i64: 1, 4, 257, 16>}]} {
    %c0 = arith.constant 0 : index
    %c0_0 = arith.constant 0 : index
    %c0_1 = arith.constant 0 : index
    %c0_2 = arith.constant 0 : index
    %0 = vector.load %arg2[%c0, %c0_0, %c0_1, %c0_2] : memref<1x4x257x16xf32, #tpu.memory_space<vmem>>, vector<1x4x257x16xf32>
    %cst = arith.constant dense<0.000000e+00> : vector<1x257x16xf32>
    %1 = vector.multi_reduction <add>, %0, %cst [1] : vector<1x4x257x16xf32> to vector<1x257x16xf32>
    %2 = vector.shape_cast %1 : vector<1x257x16xf32> to vector<1x1x257x16xf32>
    %cst_3 = arith.constant dense<0.000000e+00> : vector<1x1x16xf32>
    %3 = vector.multi_reduction <add>, %2, %cst_3 [2] : vector<1x1x257x16xf32> to vector<1x1x16xf32>
    %4 = vector.shape_cast %3 : vector<1x1x16xf32> to vector<1x1x1x16xf32>
    %cst_4 = arith.constant 9.72762646E-4 : f32
    %5 = vector.broadcast %cst_4 : f32 to vector<1x1x1x16xf32>
    %6 = arith.mulf %4, %5 : vector<1x1x1x16xf32>
    %7 = vector.broadcast %6 : vector<1x1x1x16xf32> to vector<1x4x257x16xf32>
    %8 = arith.subf %0, %7 : vector<1x4x257x16xf32>
    %9 = arith.mulf %8, %8 : vector<1x4x257x16xf32>
    %cst_5 = arith.constant dense<0.000000e+00> : vector<1x257x16xf32>
    %10 = vector.multi_reduction <add>, %9, %cst_5 [1] : vector<1x4x257x16xf32> to vector<1x257x16xf32>
    %11 = vector.shape_cast %10 : vector<1x257x16xf32> to vector<1x1x257x16xf32>
    %cst_6 = arith.constant dense<0.000000e+00> : vector<1x1x16xf32>
    %12 = vector.multi_reduction <add>, %11, %cst_6 [2] : vector<1x1x257x16xf32> to vector<1x1x16xf32>
    %13 = vector.shape_cast %12 : vector<1x1x16xf32> to vector<1x1x1x16xf32>
    %cst_7 = arith.constant 9.72762646E-4 : f32
    %14 = vector.broadcast %cst_7 : f32 to vector<1x1x1x16xf32>
    %15 = arith.mulf %13, %14 : vector<1x1x1x16xf32>
    %cst_8 = arith.constant 9.99999974E-6 : f32
    %16 = vector.broadcast %cst_8 : f32 to vector<1x1x1x16xf32>
    %17 = arith.addf %15, %16 : vector<1x1x1x16xf32>
    %18 = math.rsqrt %17 : vector<1x1x1x16xf32>
    %c0_9 = arith.constant 0 : index
    %c0_10 = arith.constant 0 : index
    %c0_11 = arith.constant 0 : index
    %c0_12 = arith.constant 0 : index
    %19 = vector.load %arg3[%c0_9, %c0_10, %c0_11, %c0_12] : memref<1x4x257x1xf32, #tpu.memory_space<vmem>>, vector<1x4x257x1xf32>
    %c0_13 = arith.constant 0 : index
    %c0_14 = arith.constant 0 : index
    %c0_15 = arith.constant 0 : index
    %c0_16 = arith.constant 0 : index
    %20 = vector.load %arg4[%c0_13, %c0_14, %c0_15, %c0_16] : memref<1x4x257x1xf32, #tpu.memory_space<vmem>>, vector<1x4x257x1xf32>
    %21 = vector.broadcast %18 : vector<1x1x1x16xf32> to vector<1x4x257x16xf32>
    %22 = arith.mulf %8, %21 : vector<1x4x257x16xf32>
    %23 = vector.broadcast %19 : vector<1x4x257x1xf32> to vector<1x4x257x16xf32>
    %24 = arith.mulf %22, %23 : vector<1x4x257x16xf32>
    %25 = vector.broadcast %20 : vector<1x4x257x1xf32> to vector<1x4x257x16xf32>
    %26 = arith.addf %24, %25 : vector<1x4x257x16xf32>
    %c0_17 = arith.constant 0 : index
    %c0_18 = arith.constant 0 : index
    %c0_19 = arith.constant 0 : index
    %c0_20 = arith.constant 0 : index
    %27 = vector.load %arg5[%c0_17, %c0_18, %c0_19, %c0_20] : memref<1x4x257x16xf32, #tpu.memory_space<vmem>>, vector<1x4x257x16xf32>
    tpu.vector_store %arg5[%c0_17, %c0_18, %c0_19, %c0_20], %26 {strides = array<i32>} : memref<1x4x257x16xf32, #tpu.memory_space<vmem>>, vector<1x4x257x16xf32>,
    return
  }
  func.func @transform_0(%arg0: i32, %arg1: i32) -> (i32, i32, i32, i32) {
    %c0_i32 = arith.constant 0 : i32
    %c0_i32_0 = arith.constant 0 : i32
    %c0_i32_1 = arith.constant 0 : i32
    return %arg0, %c0_i32, %c0_i32_0, %arg1 : i32, i32, i32, i32
  }
  func.func @transform_1(%arg0: i32, %arg1: i32) -> (i32, i32, i32, i32) {
    %c0_i32 = arith.constant 0 : i32
    %c0_i32_0 = arith.constant 0 : i32
    %c0_i32_1 = arith.constant 0 : i32
    %c0_i32_2 = arith.constant 0 : i32
    %c0_i32_3 = arith.constant 0 : i32
    return %c0_i32, %c0_i32_0, %c0_i32_1, %c0_i32_2 : i32, i32, i32, i32
  }
  func.func @transform_2(%arg0: i32, %arg1: i32) -> (i32, i32, i32, i32) {
    %c0_i32 = arith.constant 0 : i32
    %c0_i32_0 = arith.constant 0 : i32
    %c0_i32_1 = arith.constant 0 : i32
    %c0_i32_2 = arith.constant 0 : i32
    %c0_i32_3 = arith.constant 0 : i32
    return %c0_i32, %c0_i32_0, %c0_i32_1, %c0_i32_2 : i32, i32, i32, i32
  }
  func.func @transform_3(%arg0: i32, %arg1: i32) -> (i32, i32, i32, i32) {
    %c0_i32 = arith.constant 0 : i32
    %c0_i32_0 = arith.constant 0 : i32
    %c0_i32_1 = arith.constant 0 : i32
    return %arg0, %c0_i32, %c0_i32_0, %arg1 : i32, i32, i32, i32
  }
}

</mosaic_0001>

<llo_original>
// kernel: layer_norm.1
$region0: #{layer_norm.1}
  #allocation0 [shape = 'u32[]', space=smem, size = 0x4, offset = 0x4, fixed_abs, tag = 'smem constant byte address 0x4 - core index']
  #allocation1 [shape = 'u32[144,128]{1,0:T(1,128)}', space=vmem, size = 0x12000, scoped, tag = 'internal scratch']
  %s0 = inlined_call_operand.vmem [shape: f32[2,4,257,16], index: 0, kind: input, shape index: {}]
  %s1 = inlined_call_operand.vmem [shape: f32[1,4,257,1], index: 1, kind: input, shape index: {}]
  %s2 = inlined_call_operand.vmem [shape: f32[1,4,257,1], index: 2, kind: input, shape index: {}]
  %s3 = inlined_call_operand.vmem [shape: f32[2,4,257,16], index: 3, kind: output, shape index: {}]
  %s4 = sld [smem:[#allocation0]]
  $region45: #{layer_norm.1} parent=0
    _
  %s6 = ssub.s32 1, %s4
  %s7 = scalar_select 0, %s6, %s4
  loop: start=0, step=1, limit=4
  $region2: #{layer_norm.1} parent=0 // loop_pre_header
    _
  $region3: #{layer_norm.1} parent=0 // loop_header
    %s9 = sphi 0, %s13
    %p10 = scmp.ge.s32.totalorder %s9, 4
    %s16 = sphi 0, %s28
    %s17 = sphi 0, %s24
    %s18 = sphi 0, %s16
    %s19 = sphi 0, %s17
    %s20 = sphi 0, %s18
    %s21 = sphi 0, %s19
    %s33 = sphi 0, %s35
    %s36 = sphi 0, %s33
    %s37 = sphi 0, %s36
    %s53 = sphi 0, %s37
    %s57 = sphi 0, %s57
    %s59 = sphi 0, %s57
    %s60 = sphi 0, %s59
    %s74 = sphi 0, %s60
    %s78 = sphi 0, %s78
    %s80 = sphi 0, %s78
    %s81 = sphi 0, %s80
    %s95 = sphi 0, %s81
    %s103 = sphi 0, %s105
    %s106 = sphi 0, %s103
    %s107 = sphi 0, %s106
    %s123 = sphi 0, %s107
  $region4: #{layer_norm.1} parent=0 // loop_header_branch
    %12 = sbr.rel (%p10) target = $region8
  $region5: #{layer_norm.1} parent=0 // loop_body
    %s14 = ssub.s32 %s9, 1
    %s15 = ssub.s32 %s9, 2
    %s22 = sadd.s32 1, %s17
    %p23 = scmp.ge.s32.totalorder %s22, 1
    %s24 = scalar_select %p23, 0, %s22
    %s25 = sadd.s32 1, %s16
    %s26 = scalar_select %p23, %s25, %s16
    %p27 = scmp.ge.s32.totalorder %s26, 2
    %s28 = scalar_select %p27, 0, %s26
    %s29 = ssub.s32 %s16, %s28
    %s30 = ssub.s32 %s17, %s24
    %s31 = sor.u32 %s29, %s30
    %p32 = scmp.eq.s32.totalorder %s31, 0
    %s34 = sadd.s32 %s33, 1
    %s35 = scalar_select %p32, %s33, %s34
    %p38 = pneg %p32
    %p39 = scmp.eq.s32.totalorder %s9, 1
    %p40 = por %p38, %p39
    %p41 = scmp.ne.s32.totalorder %s33, %s36
    %p42 = scmp.eq.s32.totalorder %s9, 0
    %p43 = por %p41, %p42
    %p44 = scmp.ne.s32.totalorder %s33, %s36
    %p45 = scmp.eq.s32.totalorder %s14, 1
    %p46 = por %p44, %p45
    %p47 = scmp.ne.s32.totalorder %s36, %s37
    %p48 = scmp.eq.s32.totalorder %s14, 0
    %p49 = por %p47, %p48
    %p50 = scmp.ne.s32.totalorder %s36, %s37
    %p51 = scmp.eq.s32.totalorder %s15, 1
    %p52 = por %p50, %p51
    %p54 = scmp.ne.s32.totalorder %s37, %s53
    %p55 = scmp.eq.s32.totalorder %s15, 0
    %p56 = por %p54, %p55
    %s58 = sadd.s32 %s57, 1
    %p61 = scmp.eq.s32.totalorder %s9, 1
    %p62 = scmp.ne.s32.totalorder %s57, %s59
    %p63 = scmp.eq.s32.totalorder %s9, 0
    %p64 = por %p62, %p63
    %p65 = scmp.ne.s32.totalorder %s57, %s59
    %p66 = scmp.eq.s32.totalorder %s14, 1
    %p67 = por %p65, %p66
    %p68 = scmp.ne.s32.totalorder %s59, %s60
    %p69 = scmp.eq.s32.totalorder %s14, 0
    %p70 = por %p68, %p69
    %p71 = scmp.ne.s32.totalorder %s59, %s60
    %p72 = scmp.eq.s32.totalorder %s15, 1
    %p73 = por %p71, %p72
    %p75 = scmp.ne.s32.totalorder %s60, %s74
    %p76 = scmp.eq.s32.totalorder %s15, 0
    %p77 = por %p75, %p76
    %s79 = sadd.s32 %s78, 1
    %p82 = scmp.eq.s32.totalorder %s9, 1
    %p83 = scmp.ne.s32.totalorder %s78, %s80
    %p84 = scmp.eq.s32.totalorder %s9, 0
    %p85 = por %p83, %p84
    %p86 = scmp.ne.s32.totalorder %s78, %s80
    %p87 = scmp.eq.s32.totalorder %s14, 1
    %p88 = por %p86, %p87
    %p89 = scmp.ne.s32.totalorder %s80, %s81
    %p90 = scmp.eq.s32.totalorder %s14, 0
    %p91 = por %p89, %p90
    %p92 = scmp.ne.s32.totalorder %s80, %s81
    %p93 = scmp.eq.s32.totalorder %s15, 1
    %p94 = por %p92, %p93
    %p96 = scmp.ne.s32.totalorder %s81, %s95
    %p97 = scmp.eq.s32.totalorder %s15, 0
    %p98 = por %p96, %p97
    %s99 = ssub.s32 %s16, %s28
    %s100 = ssub.s32 %s17, %s24
    %s101 = sor.u32 %s99, %s100
    %p102 = scmp.eq.s32.totalorder %s101, 0
    %s104 = sadd.s32 %s103, 1
    %s105 = scalar_select %p102, %s103, %s104
    %p108 = pneg %p102
    %p109 = scmp.eq.s32.totalorder %s9, 1
    %p110 = por %p108, %p109
    %p111 = scmp.ne.s32.totalorder %s103, %s106
    %p112 = scmp.eq.s32.totalorder %s9, 0
    %p113 = por %p111, %p112
    %p114 = scmp.ne.s32.totalorder %s103, %s106
    %p115 = scmp.eq.s32.totalorder %s14, 1
    %p116 = por %p114, %p115
    %p117 = scmp.ne.s32.totalorder %s106, %s107
    %p118 = scmp.eq.s32.totalorder %s14, 0
    %p119 = por %p117, %p118
    %p120 = scmp.ne.s32.totalorder %s106, %s107
    %p121 = scmp.eq.s32.totalorder %s15, 1
    %p122 = por %p120, %p121
    %p124 = scmp.ne.s32.totalorder %s107, %s123
    %p125 = scmp.eq.s32.totalorder %s15, 0
    %p126 = por %p124, %p125
    %p127 = scmp.le.s32.totalorder 1, %s9
    %p128 = scmp.lt.s32.totalorder %s9, 3
    %p129 = pnand %p127, %p128
    %p130 = pneg %p129
    // Predicated region
    $region9: #{layer_norm.1} parent=5 // pred_check
      _
    $region10: #{layer_norm.1} parent=5 // pred_check_branch
      %132 = sbr.rel (%p129) target = $region12
    $region11: #{layer_norm.1} parent=5 // pred_region
      %s133 = ssub.s32 %s9, 1
      // Predicated region
      $region13: #{layer_norm.1} parent=11 // pred_check
        %p134 = pneg %p70
      $region14: #{layer_norm.1} parent=11 // pred_check_branch
        %136 = sbr.rel (%p134) target = $region16
      $region15: #{layer_norm.1} parent=11 // pred_region
        _
      $region16: #{layer_norm.1} parent=11 // pred_fallthru
        _
      // Predicated region
      $region17: #{layer_norm.1} parent=11 // pred_check
        %p137 = pneg %p91
      $region18: #{layer_norm.1} parent=11 // pred_check_branch
        %139 = sbr.rel (%p137) target = $region20
      $region19: #{layer_norm.1} parent=11 // pred_region
        _
      $region20: #{layer_norm.1} parent=11 // pred_fallthru
        _
    $region12: #{layer_norm.1} parent=5 // pred_fallthru
      _
    %p140 = scmp.lt.s32.totalorder %s9, 2
    // Predicated region
    $region21: #{layer_norm.1} parent=5 // pred_check
      %p141 = pneg %p140
    $region22: #{layer_norm.1} parent=5 // pred_check_branch
      %143 = sbr.rel (%p141) target = $region24
    $region23: #{layer_norm.1} parent=5 // pred_region
      // Predicated region
      $region25: #{layer_norm.1} parent=23 // pred_check
        %p144 = pneg %p43
      $region26: #{layer_norm.1} parent=23 // pred_check_branch
        %146 = sbr.rel (%p144) target = $region28
      $region27: #{layer_norm.1} parent=23 // pred_region
        %p147 = scmp.lt.s32.totalorder %s16, 1
        %s148 = scalar_select %p147, %s16, 1
        %p149 = scmp.lt.s32.totalorder %s17, 0
        %s150 = scalar_select %p149, %s17, 0
        %s151 = smul.addr %s148, 132
        %s152 = sadd.s32 %s150, %s151
        %s153 = smul.addr %s152, 8
        %s154 = scalar_lea.vmem %s0, %s153
      $region28: #{layer_norm.1} parent=23 // pred_fallthru
        _
    $region24: #{layer_norm.1} parent=5 // pred_fallthru
      _
    %p155 = scmp.le.s32.totalorder 1, %s9
    %p156 = scmp.lt.s32.totalorder %s9, 3
    %p157 = pnand %p155, %p156
    %p158 = pneg %p157
    // Predicated region
    $region29: #{layer_norm.1} parent=5 // pred_check
      _
    $region30: #{layer_norm.1} parent=5 // pred_check_branch
      %160 = sbr.rel (%p157) target = $region32
    $region31: #{layer_norm.1} parent=5 // pred_region
      %s161 = ssub.s32 %s9, 1
      %p162 = scmp.lt.s32.totalorder %s18, 1
      %s163 = scalar_select %p162, %s18, 1
      %p164 = scmp.lt.s32.totalorder %s19, 0
      %s165 = scalar_select %p164, %s19, 0
      %s166 = smul.addr %s163, 132
      %s167 = sadd.s32 %s165, %s166
      %s168 = smul.addr %s167, 8
      %s169 = scalar_lea.vmem %s0, %s168
      %p170 = pneg %p49
      %p171 = pneg %p46
      %p172 = pneg %p70
      %p173 = pneg %p67
      %p174 = pneg %p91
      %p175 = pneg %p88
      %p176 = pneg %p119
      %p177 = pneg %p116
      %p178 = scmp.lt.s32.totalorder %s18, 1
      %s179 = scalar_select %p178, %s18, 1
      %p180 = scmp.lt.s32.totalorder %s19, 0
      %s181 = scalar_select %p180, %s19, 0
      %s182 = smul.addr %s179, 132
      %s183 = sadd.s32 %s181, %s182
      %s184 = smul.addr %s183, 8
      %s185 = scalar_lea.vmem %s3, %s184
      %p186 = scmp.lt.s32.totalorder %s18, 1
      %s187 = scalar_select %p186, %s18, 1
      %p188 = scmp.lt.s32.totalorder %s19, 0
      %s189 = scalar_select %p188, %s19, 0
      %s190 = smul.addr %s187, 132
      %s191 = sadd.s32 %s189, %s190
      %s192 = smul.addr %s191, 8
      %s193 = scalar_lea.vmem %s0, %s192
      %p194 = scmp.lt.s32.totalorder %s18, 1
      %s195 = scalar_select %p194, %s18, 1
      %p196 = scmp.lt.s32.totalorder %s19, 0
      %s197 = scalar_select %p196, %s19, 0
      %s198 = smul.addr %s195, 132
      %s199 = sadd.s32 %s197, %s198
      %s200 = smul.addr %s199, 8
      %s201 = scalar_lea.vmem %s3, %s200
      %v202 = vld [vmem:[%s193] sm:$0xff]
      %v203 = vld [vmem:[%s193 + $0x8] sm:$0xff]
      %v204 = vld [vmem:[%s193 + $0x10] sm:$0xff]
      %v205 = vld [vmem:[%s193 + $0x18] sm:$0xff]
      %v206 = vld [vmem:[%s193 + $0x20] sm:$0xff]
      %v207 = vld [vmem:[%s193 + $0x28] sm:$0xff]
      %v208 = vld [vmem:[%s193 + $0x30] sm:$0xff]
      %v209 = vld [vmem:[%s193 + $0x38] sm:$0xff]
      %v210 = vld [vmem:[%s193 + $0x40] sm:$0xff]
      %v211 = vld [vmem:[%s193 + $0x48] sm:$0xff]
      %v212 = vld [vmem:[%s193 + $0x50] sm:$0xff]
      %v213 = vld [vmem:[%s193 + $0x58] sm:$0xff]
      %v214 = vld [vmem:[%s193 + $0x60] sm:$0xff]
      %v215 = vld [vmem:[%s193 + $0x68] sm:$0xff]
      %v216 = vld [vmem:[%s193 + $0x70] sm:$0xff]
      %v217 = vld [vmem:[%s193 + $0x78] sm:$0xff]
      %v218 = vld [vmem:[%s193 + $0x80] sm:$0xff]
      %v219 = vld [vmem:[%s193 + $0x88] sm:$0xff]
      %v220 = vld [vmem:[%s193 + $0x90] sm:$0xff]
      %v221 = vld [vmem:[%s193 + $0x98] sm:$0xff]
      %v222 = vld [vmem:[%s193 + $0xa0] sm:$0xff]
      %v223 = vld [vmem:[%s193 + $0xa8] sm:$0xff]
      %v224 = vld [vmem:[%s193 + $0xb0] sm:$0xff]
      %v225 = vld [vmem:[%s193 + $0xb8] sm:$0xff]
      %v226 = vld [vmem:[%s193 + $0xc0] sm:$0xff]
      %v227 = vld [vmem:[%s193 + $0xc8] sm:$0xff]
      %v228 = vld [vmem:[%s193 + $0xd0] sm:$0xff]
      %v229 = vld [vmem:[%s193 + $0xd8] sm:$0xff]
      %v230 = vld [vmem:[%s193 + $0xe0] sm:$0xff]
      %v231 = vld [vmem:[%s193 + $0xe8] sm:$0xff]
      %v232 = vld [vmem:[%s193 + $0xf0] sm:$0xff]
      %v233 = vld [vmem:[%s193 + $0xf8] sm:$0xff]
      %v234 = vld [vmem:[%s193 + $0x100] sm:$0x1]
      %v235 = vld [vmem:[%s193 + $0x108] sm:$0xff]
      %v236 = vld [vmem:[%s193 + $0x110] sm:$0xff]
      %v237 = vld [vmem:[%s193 + $0x118] sm:$0xff]
      %v238 = vld [vmem:[%s193 + $0x120] sm:$0xff]
      %v239 = vld [vmem:[%s193 + $0x128] sm:$0xff]
      %v240 = vld [vmem:[%s193 + $0x130] sm:$0xff]
      %v241 = vld [vmem:[%s193 + $0x138] sm:$0xff]
      %v242 = vld [vmem:[%s193 + $0x140] sm:$0xff]
      %v243 = vld [vmem:[%s193 + $0x148] sm:$0xff]
      %v244 = vld [vmem:[%s193 + $0x150] sm:$0xff]
      %v245 = vld [vmem:[%s193 + $0x158] sm:$0xff]
      %v246 = vld [vmem:[%s193 + $0x160] sm:$0xff]
      %v247 = vld [vmem:[%s193 + $0x168] sm:$0xff]
      %v248 = vld [vmem:[%s193 + $0x170] sm:$0xff]
      %v249 = vld [vmem:[%s193 + $0x178] sm:$0xff]
      %v250 = vld [vmem:[%s193 + $0x180] sm:$0xff]
      %v251 = vld [vmem:[%s193 + $0x188] sm:$0xff]
      %v252 = vld [vmem:[%s193 + $0x190] sm:$0xff]
      %v253 = vld [vmem:[%s193 + $0x198] sm:$0xff]
      %v254 = vld [vmem:[%s193 + $0x1a0] sm:$0xff]
      %v255 = vld [vmem:[%s193 + $0x1a8] sm:$0xff]
      %v256 = vld [vmem:[%s193 + $0x1b0] sm:$0xff]
      %v257 = vld [vmem:[%s193 + $0x1b8] sm:$0xff]
      %v258 = vld [vmem:[%s193 + $0x1c0] sm:$0xff]
      %v259 = vld [vmem:[%s193 + $0x1c8] sm:$0xff]
      %v260 = vld [vmem:[%s193 + $0x1d0] sm:$0xff]
      %v261 = vld [vmem:[%s193 + $0x1d8] sm:$0xff]
      %v262 = vld [vmem:[%s193 + $0x1e0] sm:$0xff]
      %v263 = vld [vmem:[%s193 + $0x1e8] sm:$0xff]
      %v264 = vld [vmem:[%s193 + $0x1f0] sm:$0xff]
      %v265 = vld [vmem:[%s193 + $0x1f8] sm:$0xff]
      %v266 = vld [vmem:[%s193 + $0x200] sm:$0xff]
      %v267 = vld [vmem:[%s193 + $0x208] sm:$0x1]
      %v268 = vld [vmem:[%s193 + $0x210] sm:$0xff]
      %v269 = vld [vmem:[%s193 + $0x218] sm:$0xff]
      %v270 = vld [vmem:[%s193 + $0x220] sm:$0xff]
      %v271 = vld [vmem:[%s193 + $0x228] sm:$0xff]
      %v272 = vld [vmem:[%s193 + $0x230] sm:$0xff]
      %v273 = vld [vmem:[%s193 + $0x238] sm:$0xff]
      %v274 = vld [vmem:[%s193 + $0x240] sm:$0xff]
      %v275 = vld [vmem:[%s193 + $0x248] sm:$0xff]
      %v276 = vld [vmem:[%s193 + $0x250] sm:$0xff]
      %v277 = vld [vmem:[%s193 + $0x258] sm:$0xff]
      %v278 = vld [vmem:[%s193 + $0x260] sm:$0xff]
      %v279 = vld [vmem:[%s193 + $0x268] sm:$0xff]
      %v280 = vld [vmem:[%s193 + $0x270] sm:$0xff]
      %v281 = vld [vmem:[%s193 + $0x278] sm:$0xff]
      %v282 = vld [vmem:[%s193 + $0x280] sm:$0xff]
      %v283 = vld [vmem:[%s193 + $0x288] sm:$0xff]
      %v284 = vld [vmem:[%s193 + $0x290] sm:$0xff]
      %v285 = vld [vmem:[%s193 + $0x298] sm:$0xff]
      %v286 = vld [vmem:[%s193 + $0x2a0] sm:$0xff]
      %v287 = vld [vmem:[%s193 + $0x2a8] sm:$0xff]
      %v288 = vld [vmem:[%s193 + $0x2b0] sm:$0xff]
      %v289 = vld [vmem:[%s193 + $0x2b8] sm:$0xff]
      %v290 = vld [vmem:[%s193 + $0x2c0] sm:$0xff]
      %v291 = vld [vmem:[%s193 + $0x2c8] sm:$0xff]
      %v292 = vld [vmem:[%s193 + $0x2d0] sm:$0xff]
      %v293 = vld [vmem:[%s193 + $0x2d8] sm:$0xff]
      %v294 = vld [vmem:[%s193 + $0x2e0] sm:$0xff]
      %v295 = vld [vmem:[%s193 + $0x2e8] sm:$0xff]
      %v296 = vld [vmem:[%s193 + $0x2f0] sm:$0xff]
      %v297 = vld [vmem:[%s193 + $0x2f8] sm:$0xff]
      %v298 = vld [vmem:[%s193 + $0x300] sm:$0xff]
      %v299 = vld [vmem:[%s193 + $0x308] sm:$0xff]
      %v300 = vld [vmem:[%s193 + $0x310] sm:$0x1]
      %v301 = vld [vmem:[%s193 + $0x318] sm:$0xff]
      %v302 = vld [vmem:[%s193 + $0x320] sm:$0xff]
      %v303 = vld [vmem:[%s193 + $0x328] sm:$0xff]
      %v304 = vld [vmem:[%s193 + $0x330] sm:$0xff]
      %v305 = vld [vmem:[%s193 + $0x338] sm:$0xff]
      %v306 = vld [vmem:[%s193 + $0x340] sm:$0xff]
      %v307 = vld [vmem:[%s193 + $0x348] sm:$0xff]
      %v308 = vld [vmem:[%s193 + $0x350] sm:$0xff]
      %v309 = vld [vmem:[%s193 + $0x358] sm:$0xff]
      %v310 = vld [vmem:[%s193 + $0x360] sm:$0xff]
      %v311 = vld [vmem:[%s193 + $0x368] sm:$0xff]
      %v312 = vld [vmem:[%s193 + $0x370] sm:$0xff]
      %v313 = vld [vmem:[%s193 + $0x378] sm:$0xff]
      %v314 = vld [vmem:[%s193 + $0x380] sm:$0xff]
      %v315 = vld [vmem:[%s193 + $0x388] sm:$0xff]
      %v316 = vld [vmem:[%s193 + $0x390] sm:$0xff]
      %v317 = vld [vmem:[%s193 + $0x398] sm:$0xff]
      %v318 = vld [vmem:[%s193 + $0x3a0] sm:$0xff]
      %v319 = vld [vmem:[%s193 + $0x3a8] sm:$0xff]
      %v320 = vld [vmem:[%s193 + $0x3b0] sm:$0xff]
      %v321 = vld [vmem:[%s193 + $0x3b8] sm:$0xff]
      %v322 = vld [vmem:[%s193 + $0x3c0] sm:$0xff]
      %v323 = vld [vmem:[%s193 + $0x3c8] sm:$0xff]
      %v324 = vld [vmem:[%s193 + $0x3d0] sm:$0xff]
      %v325 = vld [vmem:[%s193 + $0x3d8] sm:$0xff]
      %v326 = vld [vmem:[%s193 + $0x3e0] sm:$0xff]
      %v327 = vld [vmem:[%s193 + $0x3e8] sm:$0xff]
      %v328 = vld [vmem:[%s193 + $0x3f0] sm:$0xff]
      %v329 = vld [vmem:[%s193 + $0x3f8] sm:$0xff]
      %v330 = vld [vmem:[%s193 + $0x400] sm:$0xff]
      %v331 = vld [vmem:[%s193 + $0x408] sm:$0xff]
      %v332 = vld [vmem:[%s193 + $0x410] sm:$0xff]
      %v333 = vld [vmem:[%s193 + $0x418] sm:$0x1]
      %vm334 = vcmask 130048
      %v335 = vsel %vm334, %v202, 0.0
      %v336 = vsel %vm334, %v235, 0.0
      %v337 = vadd.f32 %v335, %v336
      %v338 = vsel %vm334, %v268, 0.0
      %v339 = vadd.f32 %v337, %v338
      %v340 = vsel %vm334, %v301, 0.0
      %v341 = vadd.f32 %v339, %v340
      %v342 = vsel %vm334, %v203, 0.0
      %v343 = vsel %vm334, %v236, 0.0
      %v344 = vadd.f32 %v342, %v343
      %v345 = vsel %vm334, %v269, 0.0
      %v346 = vadd.f32 %v344, %v345
      %v347 = vsel %vm334, %v302, 0.0
      %v348 = vadd.f32 %v346, %v347
      %v349 = vsel %vm334, %v204, 0.0
      %v350 = vsel %vm334, %v237, 0.0
      %v351 = vadd.f32 %v349, %v350
      %v352 = vsel %vm334, %v270, 0.0
      %v353 = vadd.f32 %v351, %v352
      %v354 = vsel %vm334, %v303, 0.0
      %v355 = vadd.f32 %v353, %v354
      %v356 = vsel %vm334, %v205, 0.0
      %v357 = vsel %vm334, %v238, 0.0
      %v358 = vadd.f32 %v356, %v357
      %v359 = vsel %vm334, %v271, 0.0
      %v360 = vadd.f32 %v358, %v359
      %v361 = vsel %vm334, %v304, 0.0
      %v362 = vadd.f32 %v360, %v361
      %v363 = vsel %vm334, %v206, 0.0
      %v364 = vsel %vm334, %v239, 0.0
      %v365 = vadd.f32 %v363, %v364
      %v366 = vsel %vm334, %v272, 0.0
      %v367 = vadd.f32 %v365, %v366
      %v368 = vsel %vm334, %v305, 0.0
      %v369 = vadd.f32 %v367, %v368
      %v370 = vsel %vm334, %v207, 0.0
      %v371 = vsel %vm334, %v240, 0.0
      %v372 = vadd.f32 %v370, %v371
      %v373 = vsel %vm334, %v273, 0.0
      %v374 = vadd.f32 %v372, %v373
      %v375 = vsel %vm334, %v306, 0.0
      %v376 = vadd.f32 %v374, %v375
      %v377 = vsel %vm334, %v208, 0.0
      %v378 = vsel %vm334, %v241, 0.0
      %v379 = vadd.f32 %v377, %v378
      %v380 = vsel %vm334, %v274, 0.0
      %v381 = vadd.f32 %v379, %v380
      %v382 = vsel %vm334, %v307, 0.0
      %v383 = vadd.f32 %v381, %v382
      %v384 = vsel %vm334, %v209, 0.0
      %v385 = vsel %vm334, %v242, 0.0
      %v386 = vadd.f32 %v384, %v385
      %v387 = vsel %vm334, %v275, 0.0
      %v388 = vadd.f32 %v386, %v387
      %v389 = vsel %vm334, %v308, 0.0
      %v390 = vadd.f32 %v388, %v389
      %v391 = vsel %vm334, %v210, 0.0
      %v392 = vsel %vm334, %v243, 0.0
      %v393 = vadd.f32 %v391, %v392
      %v394 = vsel %vm334, %v276, 0.0
      %v395 = vadd.f32 %v393, %v394
      %v396 = vsel %vm334, %v309, 0.0
      %v397 = vadd.f32 %v395, %v396
      %v398 = vsel %vm334, %v211, 0.0
      %v399 = vsel %vm334, %v244, 0.0
      %v400 = vadd.f32 %v398, %v399
      %v401 = vsel %vm334, %v277, 0.0
      %v402 = vadd.f32 %v400, %v401
      %v403 = vsel %vm334, %v310, 0.0
      %v404 = vadd.f32 %v402, %v403
      %v405 = vsel %vm334, %v212, 0.0
      %v406 = vsel %vm334, %v245, 0.0
      %v407 = vadd.f32 %v405, %v406
      %v408 = vsel %vm334, %v278, 0.0
      %v409 = vadd.f32 %v407, %v408
      %v410 = vsel %vm334, %v311, 0.0
      %v411 = vadd.f32 %v409, %v410
      %v412 = vsel %vm334, %v213, 0.0
      %v413 = vsel %vm334, %v246, 0.0
      %v414 = vadd.f32 %v412, %v413
      %v415 = vsel %vm334, %v279, 0.0
      %v416 = vadd.f32 %v414, %v415
      %v417 = vsel %vm334, %v312, 0.0
      %v418 = vadd.f32 %v416, %v417
      %v419 = vsel %vm334, %v214, 0.0
      %v420 = vsel %vm334, %v247, 0.0
      %v421 = vadd.f32 %v419, %v420
      %v422 = vsel %vm334, %v280, 0.0
      %v423 = vadd.f32 %v421, %v422
      %v424 = vsel %vm334, %v313, 0.0
      %v425 = vadd.f32 %v423, %v424
      %v426 = vsel %vm334, %v215, 0.0
      %v427 = vsel %vm334, %v248, 0.0
      %v428 = vadd.f32 %v426, %v427
      %v429 = vsel %vm334, %v281, 0.0
      %v430 = vadd.f32 %v428, %v429
      %v431 = vsel %vm334, %v314, 0.0
      %v432 = vadd.f32 %v430, %v431
      %v433 = vsel %vm334, %v216, 0.0
      %v434 = vsel %vm334, %v249, 0.0
      %v435 = vadd.f32 %v433, %v434
      %v436 = vsel %vm334, %v282, 0.0
      %v437 = vadd.f32 %v435, %v436
      %v438 = vsel %vm334, %v315, 0.0
      %v439 = vadd.f32 %v437, %v438
      %v440 = vsel %vm334, %v217, 0.0
      %v441 = vsel %vm334, %v250, 0.0
      %v442 = vadd.f32 %v440, %v441
      %v443 = vsel %vm334, %v283, 0.0
      %v444 = vadd.f32 %v442, %v443
      %v445 = vsel %vm334, %v316, 0.0
      %v446 = vadd.f32 %v444, %v445
      %v447 = vsel %vm334, %v218, 0.0
      %v448 = vsel %vm334, %v251, 0.0
      %v449 = vadd.f32 %v447, %v448
      %v450 = vsel %vm334, %v284, 0.0
      %v451 = vadd.f32 %v449, %v450
      %v452 = vsel %vm334, %v317, 0.0
      %v453 = vadd.f32 %v451, %v452
      %v454 = vsel %vm334, %v219, 0.0
      %v455 = vsel %vm334, %v252, 0.0
      %v456 = vadd.f32 %v454, %v455
      %v457 = vsel %vm334, %v285, 0.0
      %v458 = vadd.f32 %v456, %v457
      %v459 = vsel %vm334, %v318, 0.0
      %v460 = vadd.f32 %v458, %v459
      %v461 = vsel %vm334, %v220, 0.0
      %v462 = vsel %vm334, %v253, 0.0
      %v463 = vadd.f32 %v461, %v462
      %v464 = vsel %vm334, %v286, 0.0
      %v465 = vadd.f32 %v463, %v464
      %v466 = vsel %vm334, %v319, 0.0
      %v467 = vadd.f32 %v465, %v466
      %v468 = vsel %vm334, %v221, 0.0
      %v469 = vsel %vm334, %v254, 0.0
      %v470 = vadd.f32 %v468, %v469
      %v471 = vsel %vm334, %v287, 0.0
      %v472 = vadd.f32 %v470, %v471
      %v473 = vsel %vm334, %v320, 0.0
      %v474 = vadd.f32 %v472, %v473
      %v475 = vsel %vm334, %v222, 0.0
      %v476 = vsel %vm334, %v255, 0.0
      %v477 = vadd.f32 %v475, %v476
      %v478 = vsel %vm334, %v288, 0.0
      %v479 = vadd.f32 %v477, %v478
      %v480 = vsel %vm334, %v321, 0.0
      %v481 = vadd.f32 %v479, %v480
      %v482 = vsel %vm334, %v223, 0.0
      %v483 = vsel %vm334, %v256, 0.0
      %v484 = vadd.f32 %v482, %v483
      %v485 = vsel %vm334, %v289, 0.0
      %v486 = vadd.f32 %v484, %v485
      %v487 = vsel %vm334, %v322, 0.0
      %v488 = vadd.f32 %v486, %v487
      %v489 = vsel %vm334, %v224, 0.0
      %v490 = vsel %vm334, %v257, 0.0
      %v491 = vadd.f32 %v489, %v490
      %v492 = vsel %vm334, %v290, 0.0
      %v493 = vadd.f32 %v491, %v492
      %v494 = vsel %vm334, %v323, 0.0
      %v495 = vadd.f32 %v493, %v494
      %v496 = vsel %vm334, %v225, 0.0
      %v497 = vsel %vm334, %v258, 0.0
      %v498 = vadd.f32 %v496, %v497
      %v499 = vsel %vm334, %v291, 0.0
      %v500 = vadd.f32 %v498, %v499
      %v501 = vsel %vm334, %v324, 0.0
      %v502 = vadd.f32 %v500, %v501
      %v503 = vsel %vm334, %v226, 0.0
      %v504 = vsel %vm334, %v259, 0.0
      %v505 = vadd.f32 %v503, %v504
      %v506 = vsel %vm334, %v292, 0.0
      %v507 = vadd.f32 %v505, %v506
      %v508 = vsel %vm334, %v325, 0.0
      %v509 = vadd.f32 %v507, %v508
      %v510 = vsel %vm334, %v227, 0.0
      %v511 = vsel %vm334, %v260, 0.0
      %v512 = vadd.f32 %v510, %v511
      %v513 = vsel %vm334, %v293, 0.0
      %v514 = vadd.f32 %v512, %v513
      %v515 = vsel %vm334, %v326, 0.0
      %v516 = vadd.f32 %v514, %v515
      %v517 = vsel %vm334, %v228, 0.0
      %v518 = vsel %vm334, %v261, 0.0
      %v519 = vadd.f32 %v517, %v518
      %v520 = vsel %vm334, %v294, 0.0
      %v521 = vadd.f32 %v519, %v520
      %v522 = vsel %vm334, %v327, 0.0
      %v523 = vadd.f32 %v521, %v522
      %v524 = vsel %vm334, %v229, 0.0
      %v525 = vsel %vm334, %v262, 0.0
      %v526 = vadd.f32 %v524, %v525
      %v527 = vsel %vm334, %v295, 0.0
      %v528 = vadd.f32 %v526, %v527
      %v529 = vsel %vm334, %v328, 0.0
      %v530 = vadd.f32 %v528, %v529
      %v531 = vsel %vm334, %v230, 0.0
      %v532 = vsel %vm334, %v263, 0.0
      %v533 = vadd.f32 %v531, %v532
      %v534 = vsel %vm334, %v296, 0.0
      %v535 = vadd.f32 %v533, %v534
      %v536 = vsel %vm334, %v329, 0.0
      %v537 = vadd.f32 %v535, %v536
      %v538 = vsel %vm334, %v231, 0.0
      %v539 = vsel %vm334, %v264, 0.0
      %v540 = vadd.f32 %v538, %v539
      %v541 = vsel %vm334, %v297, 0.0
      %v542 = vadd.f32 %v540, %v541
      %v543 = vsel %vm334, %v330, 0.0
      %v544 = vadd.f32 %v542, %v543
      %v545 = vsel %vm334, %v232, 0.0
      %v546 = vsel %vm334, %v265, 0.0
      %v547 = vadd.f32 %v545, %v546
      %v548 = vsel %vm334, %v298, 0.0
      %v549 = vadd.f32 %v547, %v548
      %v550 = vsel %vm334, %v331, 0.0
      %v551 = vadd.f32 %v549, %v550
      %v552 = vsel %vm334, %v233, 0.0
      %v553 = vsel %vm334, %v266, 0.0
      %v554 = vadd.f32 %v552, %v553
      %v555 = vsel %vm334, %v299, 0.0
      %v556 = vadd.f32 %v554, %v555
      %v557 = vsel %vm334, %v332, 0.0
      %v558 = vadd.f32 %v556, %v557
      %vm559 = vcmask 122880
      %v560 = vsel %vm559, %v234, 0.0
      %v561 = vsel %vm559, %v267, 0.0
      %v562 = vadd.f32 %v560, %v561
      %v563 = vsel %vm559, %v300, 0.0
      %v564 = vadd.f32 %v562, %v563
      %v565 = vsel %vm559, %v333, 0.0
      %v566 = vadd.f32 %v564, %v565
      %v567 = vsel %vm334, %v341, 0.0
      %v568 = vsel %vm334, %v348, 0.0
      %v569 = vadd.f32 %v567, %v568
      %v570 = vsel %vm334, %v355, 0.0
      %v571 = vadd.f32 %v569, %v570
      %v572 = vsel %vm334, %v362, 0.0
      %v573 = vadd.f32 %v571, %v572
      %v574 = vsel %vm334, %v369, 0.0
      %v575 = vadd.f32 %v573, %v574
      %v576 = vsel %vm334, %v376, 0.0
      %v577 = vadd.f32 %v575, %v576
      %v578 = vsel %vm334, %v383, 0.0
      %v579 = vadd.f32 %v577, %v578
      %v580 = vsel %vm334, %v390, 0.0
      %v581 = vadd.f32 %v579, %v580
      %v582 = vsel %vm334, %v397, 0.0
      %v583 = vadd.f32 %v581, %v582
      %v584 = vsel %vm334, %v404, 0.0
      %v585 = vadd.f32 %v583, %v584
      %v586 = vsel %vm334, %v411, 0.0
      %v587 = vadd.f32 %v585, %v586
      %v588 = vsel %vm334, %v418, 0.0
      %v589 = vadd.f32 %v587, %v588
      %v590 = vsel %vm334, %v425, 0.0
      %v591 = vadd.f32 %v589, %v590
      %v592 = vsel %vm334, %v432, 0.0
      %v593 = vadd.f32 %v591, %v592
      %v594 = vsel %vm334, %v439, 0.0
      %v595 = vadd.f32 %v593, %v594
      %v596 = vsel %vm334, %v446, 0.0
      %v597 = vadd.f32 %v595, %v596
      %v598 = vsel %vm334, %v453, 0.0
      %v599 = vadd.f32 %v597, %v598
      %v600 = vsel %vm334, %v460, 0.0
      %v601 = vadd.f32 %v599, %v600
      %v602 = vsel %vm334, %v467, 0.0
      %v603 = vadd.f32 %v601, %v602
      %v604 = vsel %vm334, %v474, 0.0
      %v605 = vadd.f32 %v603, %v604
      %v606 = vsel %vm334, %v481, 0.0
      %v607 = vadd.f32 %v605, %v606
      %v608 = vsel %vm334, %v488, 0.0
      %v609 = vadd.f32 %v607, %v608
      %v610 = vsel %vm334, %v495, 0.0
      %v611 = vadd.f32 %v609, %v610
      %v612 = vsel %vm334, %v502, 0.0
      %v613 = vadd.f32 %v611, %v612
      %v614 = vsel %vm334, %v509, 0.0
      %v615 = vadd.f32 %v613, %v614
      %v616 = vsel %vm334, %v516, 0.0
      %v617 = vadd.f32 %v615, %v616
      %v618 = vsel %vm334, %v523, 0.0
      %v619 = vadd.f32 %v617, %v618
      %v620 = vsel %vm334, %v530, 0.0
      %v621 = vadd.f32 %v619, %v620
      %v622 = vsel %vm334, %v537, 0.0
      %v623 = vadd.f32 %v621, %v622
      %v624 = vsel %vm334, %v544, 0.0
      %v625 = vadd.f32 %v623, %v624
      %v626 = vsel %vm334, %v551, 0.0
      %v627 = vadd.f32 %v625, %v626
      %v628 = vsel %vm334, %v558, 0.0
      %v629 = vadd.f32 %v627, %v628
      %v630 = vsel %vm559, %v566, 0.0
      %v631 = vadd.f32 %v629, %v630
      %v632 = vrot.slane %v631, 4
      %v633 = vadd.f32 %v631, %v632
      %v634 = vrot.slane %v633, 2
      %v635 = vadd.f32 %v633, %v634
      %v636 = vrot.slane %v635, 1
      %v637 = vadd.f32 %v635, %v636
      %v638 = vmul.f32 %v637, 0.00097276265
      %v639 = vsub.f32 %v202, %v638
      %v640 = vsub.f32 %v203, %v638
      %v641 = vsub.f32 %v204, %v638
      %v642 = vsub.f32 %v205, %v638
      %v643 = vsub.f32 %v206, %v638
      %v644 = vsub.f32 %v207, %v638
      %v645 = vsub.f32 %v208, %v638
      %v646 = vsub.f32 %v209, %v638
      %v647 = vsub.f32 %v210, %v638
      %v648 = vsub.f32 %v211, %v638
      %v649 = vsub.f32 %v212, %v638
      %v650 = vsub.f32 %v213, %v638
      %v651 = vsub.f32 %v214, %v638
      %v652 = vsub.f32 %v215, %v638
      %v653 = vsub.f32 %v216, %v638
      %v654 = vsub.f32 %v217, %v638
      %v655 = vsub.f32 %v218, %v638
      %v656 = vsub.f32 %v219, %v638
      %v657 = vsub.f32 %v220, %v638
      %v658 = vsub.f32 %v221, %v638
      %v659 = vsub.f32 %v222, %v638
      %v660 = vsub.f32 %v223, %v638
      %v661 = vsub.f32 %v224, %v638
      %v662 = vsub.f32 %v225, %v638
      %v663 = vsub.f32 %v226, %v638
      %v664 = vsub.f32 %v227, %v638
      %v665 = vsub.f32 %v228, %v638
      %v666 = vsub.f32 %v229, %v638
      %v667 = vsub.f32 %v230, %v638
      %v668 = vsub.f32 %v231, %v638
      %v669 = vsub.f32 %v232, %v638
      %v670 = vsub.f32 %v233, %v638
      %v671 = vsub.f32 %v234, %v638
      %v672 = vsub.f32 %v235, %v638
      %v673 = vsub.f32 %v236, %v638
      %v674 = vsub.f32 %v237, %v638
      %v675 = vsub.f32 %v238, %v638
      %v676 = vsub.f32 %v239, %v638
      %v677 = vsub.f32 %v240, %v638
      %v678 = vsub.f32 %v241, %v638
      %v679 = vsub.f32 %v242, %v638
      %v680 = vsub.f32 %v243, %v638
      %v681 = vsub.f32 %v244, %v638
      %v682 = vsub.f32 %v245, %v638
      %v683 = vsub.f32 %v246, %v638
      %v684 = vsub.f32 %v247, %v638
      %v685 = vsub.f32 %v248, %v638
      %v686 = vsub.f32 %v249, %v638
      %v687 = vsub.f32 %v250, %v638
      %v688 = vsub.f32 %v251, %v638
      %v689 = vsub.f32 %v252, %v638
      %v690 = vsub.f32 %v253, %v638
      %v691 = vsub.f32 %v254, %v638
      %v692 = vsub.f32 %v255, %v638
      %v693 = vsub.f32 %v256, %v638
      %v694 = vsub.f32 %v257, %v638
      %v695 = vsub.f32 %v258, %v638
      %v696 = vsub.f32 %v259, %v638
      %v697 = vsub.f32 %v260, %v638
      %v698 = vsub.f32 %v261, %v638
      %v699 = vsub.f32 %v262, %v638
      %v700 = vsub.f32 %v263, %v638
      %v701 = vsub.f32 %v264, %v638
      %v702 = vsub.f32 %v265, %v638
      %v703 = vsub.f32 %v266, %v638
      %v704 = vsub.f32 %v267, %v638
      %v705 = vsub.f32 %v268, %v638
      %v706 = vsub.f32 %v269, %v638
      %v707 = vsub.f32 %v270, %v638
      %v708 = vsub.f32 %v271, %v638
      %v709 = vsub.f32 %v272, %v638
      %v710 = vsub.f32 %v273, %v638
      %v711 = vsub.f32 %v274, %v638
      %v712 = vsub.f32 %v275, %v638
      %v713 = vsub.f32 %v276, %v638
      %v714 = vsub.f32 %v277, %v638
      %v715 = vsub.f32 %v278, %v638
      %v716 = vsub.f32 %v279, %v638
      %v717 = vsub.f32 %v280, %v638
      %v718 = vsub.f32 %v281, %v638
      %v719 = vsub.f32 %v282, %v638
      %v720 = vsub.f32 %v283, %v638
      %v721 = vsub.f32 %v284, %v638
      %v722 = vsub.f32 %v285, %v638
      %v723 = vsub.f32 %v286, %v638
      %v724 = vsub.f32 %v287, %v638
      %v725 = vsub.f32 %v288, %v638
      %v726 = vsub.f32 %v289, %v638
      %v727 = vsub.f32 %v290, %v638
      %v728 = vsub.f32 %v291, %v638
      %v729 = vsub.f32 %v292, %v638
      %v730 = vsub.f32 %v293, %v638
      %v731 = vsub.f32 %v294, %v638
      %v732 = vsub.f32 %v295, %v638
      %v733 = vsub.f32 %v296, %v638
      %v734 = vsub.f32 %v297, %v638
      %v735 = vsub.f32 %v298, %v638
      %v736 = vsub.f32 %v299, %v638
      %v737 = vsub.f32 %v300, %v638
      %v738 = vsub.f32 %v301, %v638
      %v739 = vsub.f32 %v302, %v638
      %v740 = vsub.f32 %v303, %v638
      %v741 = vsub.f32 %v304, %v638
      %v742 = vsub.f32 %v305, %v638
      %v743 = vsub.f32 %v306, %v638
      %v744 = vsub.f32 %v307, %v638
      %v745 = vsub.f32 %v308, %v638
      %v746 = vsub.f32 %v309, %v638
      %v747 = vsub.f32 %v310, %v638
      %v748 = vsub.f32 %v311, %v638
      %v749 = vsub.f32 %v312, %v638
      %v750 = vsub.f32 %v313, %v638
      %v751 = vsub.f32 %v314, %v638
      %v752 = vsub.f32 %v315, %v638
      %v753 = vsub.f32 %v316, %v638
      %v754 = vsub.f32 %v317, %v638
      %v755 = vsub.f32 %v318, %v638
      %v756 = vsub.f32 %v319, %v638
      %v757 = vsub.f32 %v320, %v638
      %v758 = vsub.f32 %v321, %v638
      %v759 = vsub.f32 %v322, %v638
      %v760 = vsub.f32 %v323, %v638
      %v761 = vsub.f32 %v324, %v638
      %v762 = vsub.f32 %v325, %v638
      %v763 = vsub.f32 %v326, %v638
      %v764 = vsub.f32 %v327, %v638
      %v765 = vsub.f32 %v328, %v638
      %v766 = vsub.f32 %v329, %v638
      %v767 = vsub.f32 %v330, %v638
      %v768 = vsub.f32 %v331, %v638
      %v769 = vsub.f32 %v332, %v638
      %v770 = vsub.f32 %v333, %v638
      %v771 = vmul.f32 %v639, %v639
      %v772 = vmul.f32 %v640, %v640
      %v773 = vmul.f32 %v641, %v641
      %v774 = vmul.f32 %v642, %v642
      %v775 = vmul.f32 %v643, %v643
      %v776 = vmul.f32 %v644, %v644
      %v777 = vmul.f32 %v645, %v645
      %v778 = vmul.f32 %v646, %v646
      %v779 = vmul.f32 %v647, %v647
      %v780 = vmul.f32 %v648, %v648
      %v781 = vmul.f32 %v649, %v649
      %v782 = vmul.f32 %v650, %v650
      %v783 = vmul.f32 %v651, %v651
      %v784 = vmul.f32 %v652, %v652
      %v785 = vmul.f32 %v653, %v653
      %v786 = vmul.f32 %v654, %v654
      %v787 = vmul.f32 %v655, %v655
      %v788 = vmul.f32 %v656, %v656
      %v789 = vmul.f32 %v657, %v657
      %v790 = vmul.f32 %v658, %v658
      %v791 = vmul.f32 %v659, %v659
      %v792 = vmul.f32 %v660, %v660
      %v793 = vmul.f32 %v661, %v661
      %v794 = vmul.f32 %v662, %v662
      %v795 = vmul.f32 %v663, %v663
      %v796 = vmul.f32 %v664, %v664
      %v797 = vmul.f32 %v665, %v665
      %v798 = vmul.f32 %v666, %v666
      %v799 = vmul.f32 %v667, %v667
      %v800 = vmul.f32 %v668, %v668
      %v801 = vmul.f32 %v669, %v669
      %v802 = vmul.f32 %v670, %v670
      %v803 = vmul.f32 %v671, %v671
      %v804 = vmul.f32 %v672, %v672
      %v805 = vmul.f32 %v673, %v673
      %v806 = vmul.f32 %v674, %v674
      %v807 = vmul.f32 %v675, %v675
      %v808 = vmul.f32 %v676, %v676
      %v809 = vmul.f32 %v677, %v677
      %v810 = vmul.f32 %v678, %v678
      %v811 = vmul.f32 %v679, %v679
      %v812 = vmul.f32 %v680, %v680
      %v813 = vmul.f32 %v681, %v681
      %v814 = vmul.f32 %v682, %v682
      %v815 = vmul.f32 %v683, %v683
      %v816 = vmul.f32 %v684, %v684
      %v817 = vmul.f32 %v685, %v685
      %v818 = vmul.f32 %v686, %v686
      %v819 = vmul.f32 %v687, %v687
      %v820 = vmul.f32 %v688, %v688
      %v821 = vmul.f32 %v689, %v689
      %v822 = vmul.f32 %v690, %v690
      %v823 = vmul.f32 %v691, %v691
      %v824 = vmul.f32 %v692, %v692
      %v825 = vmul.f32 %v693, %v693
      %v826 = vmul.f32 %v694, %v694
      %v827 = vmul.f32 %v695, %v695
      %v828 = vmul.f32 %v696, %v696
      %v829 = vmul.f32 %v697, %v697
      %v830 = vmul.f32 %v698, %v698
      %v831 = vmul.f32 %v699, %v699
      %v832 = vmul.f32 %v700, %v700
      %v833 = vmul.f32 %v701, %v701
      %v834 = vmul.f32 %v702, %v702
      %v835 = vmul.f32 %v703, %v703
      %v836 = vmul.f32 %v704, %v704
      %v837 = vmul.f32 %v705, %v705
      %v838 = vmul.f32 %v706, %v706
      %v839 = vmul.f32 %v707, %v707
      %v840 = vmul.f32 %v708, %v708
      %v841 = vmul.f32 %v709, %v709
      %v842 = vmul.f32 %v710, %v710
      %v843 = vmul.f32 %v711, %v711
      %v844 = vmul.f32 %v712, %v712
      %v845 = vmul.f32 %v713, %v713
      %v846 = vmul.f32 %v714, %v714
      %v847 = vmul.f32 %v715, %v715
      %v848 = vmul.f32 %v716, %v716
      %v849 = vmul.f32 %v717, %v717
      %v850 = vmul.f32 %v718, %v718
      %v851 = vmul.f32 %v719, %v719
      %v852 = vmul.f32 %v720, %v720
      %v853 = vmul.f32 %v721, %v721
      %v854 = vmul.f32 %v722, %v722
      %v855 = vmul.f32 %v723, %v723
      %v856 = vmul.f32 %v724, %v724
      %v857 = vmul.f32 %v725, %v725
      %v858 = vmul.f32 %v726, %v726
      %v859 = vmul.f32 %v727, %v727
      %v860 = vmul.f32 %v728, %v728
      %v861 = vmul.f32 %v729, %v729
      %v862 = vmul.f32 %v730, %v730
      %v863 = vmul.f32 %v731, %v731
      %v864 = vmul.f32 %v732, %v732
      %v865 = vmul.f32 %v733, %v733
      %v866 = vmul.f32 %v734, %v734
      %v867 = vmul.f32 %v735, %v735
      %v868 = vmul.f32 %v736, %v736
      %v869 = vmul.f32 %v737, %v737
      %v870 = vmul.f32 %v738, %v738
      %v871 = vmul.f32 %v739, %v739
      %v872 = vmul.f32 %v740, %v740
      %v873 = vmul.f32 %v741, %v741
      %v874 = vmul.f32 %v742, %v742
      %v875 = vmul.f32 %v743, %v743
      %v876 = vmul.f32 %v744, %v744
      %v877 = vmul.f32 %v745, %v745
      %v878 = vmul.f32 %v746, %v746
      %v879 = vmul.f32 %v747, %v747
      %v880 = vmul.f32 %v748, %v748
      %v881 = vmul.f32 %v749, %v749
      %v882 = vmul.f32 %v750, %v750
      %v883 = vmul.f32 %v751, %v751
      %v884 = vmul.f32 %v752, %v752
      %v885 = vmul.f32 %v753, %v753
      %v886 = vmul.f32 %v754, %v754
      %v887 = vmul.f32 %v755, %v755
      %v888 = vmul.f32 %v756, %v756
      %v889 = vmul.f32 %v757, %v757
      %v890 = vmul.f32 %v758, %v758
      %v891 = vmul.f32 %v759, %v759
      %v892 = vmul.f32 %v760, %v760
      %v893 = vmul.f32 %v761, %v761
      %v894 = vmul.f32 %v762, %v762
      %v895 = vmul.f32 %v763, %v763
      %v896 = vmul.f32 %v764, %v764
      %v897 = vmul.f32 %v765, %v765
      %v898 = vmul.f32 %v766, %v766
      %v899 = vmul.f32 %v767, %v767
      %v900 = vmul.f32 %v768, %v768
      %v901 = vmul.f32 %v769, %v769
      %v902 = vmul.f32 %v770, %v770
      %v903 = vsel %vm334, %v771, 0.0
      %v904 = vsel %vm334, %v804, 0.0
      %v905 = vadd.f32 %v903, %v904
      %v906 = vsel %vm334, %v837, 0.0
      %v907 = vadd.f32 %v905, %v906
      %v908 = vsel %vm334, %v870, 0.0
      %v909 = vadd.f32 %v907, %v908
      %v910 = vsel %vm334, %v772, 0.0
      %v911 = vsel %vm334, %v805, 0.0
      %v912 = vadd.f32 %v910, %v911
      %v913 = vsel %vm334, %v838, 0.0
      %v914 = vadd.f32 %v912, %v913
      %v915 = vsel %vm334, %v871, 0.0
      %v916 = vadd.f32 %v914, %v915
      %v917 = vsel %vm334, %v773, 0.0
      %v918 = vsel %vm334, %v806, 0.0
      %v919 = vadd.f32 %v917, %v918
      %v920 = vsel %vm334, %v839, 0.0
      %v921 = vadd.f32 %v919, %v920
      %v922 = vsel %vm334, %v872, 0.0
      %v923 = vadd.f32 %v921, %v922
      %v924 = vsel %vm334, %v774, 0.0
      %v925 = vsel %vm334, %v807, 0.0
      %v926 = vadd.f32 %v924, %v925
      %v927 = vsel %vm334, %v840, 0.0
      %v928 = vadd.f32 %v926, %v927
      %v929 = vsel %vm334, %v873, 0.0
      %v930 = vadd.f32 %v928, %v929
      %v931 = vsel %vm334, %v775, 0.0
      %v932 = vsel %vm334, %v808, 0.0
      %v933 = vadd.f32 %v931, %v932
      %v934 = vsel %vm334, %v841, 0.0
      %v935 = vadd.f32 %v933, %v934
      %v936 = vsel %vm334, %v874, 0.0
      %v937 = vadd.f32 %v935, %v936
      %v938 = vsel %vm334, %v776, 0.0
      %v939 = vsel %vm334, %v809, 0.0
      %v940 = vadd.f32 %v938, %v939
      %v941 = vsel %vm334, %v842, 0.0
      %v942 = vadd.f32 %v940, %v941
      %v943 = vsel %vm334, %v875, 0.0
      %v944 = vadd.f32 %v942, %v943
      %v945 = vsel %vm334, %v777, 0.0
      %v946 = vsel %vm334, %v810, 0.0
      %v947 = vadd.f32 %v945, %v946
      %v948 = vsel %vm334, %v843, 0.0
      %v949 = vadd.f32 %v947, %v948
      %v950 = vsel %vm334, %v876, 0.0
      %v951 = vadd.f32 %v949, %v950
      %v952 = vsel %vm334, %v778, 0.0
      %v953 = vsel %vm334, %v811, 0.0
      %v954 = vadd.f32 %v952, %v953
      %v955 = vsel %vm334, %v844, 0.0
      %v956 = vadd.f32 %v954, %v955
      %v957 = vsel %vm334, %v877, 0.0
      %v958 = vadd.f32 %v956, %v957
      %v959 = vsel %vm334, %v779, 0.0
      %v960 = vsel %vm334, %v812, 0.0
      %v961 = vadd.f32 %v959, %v960
      %v962 = vsel %vm334, %v845, 0.0
      %v963 = vadd.f32 %v961, %v962
      %v964 = vsel %vm334, %v878, 0.0
      %v965 = vadd.f32 %v963, %v964
      %v966 = vsel %vm334, %v780, 0.0
      %v967 = vsel %vm334, %v813, 0.0
      %v968 = vadd.f32 %v966, %v967
      %v969 = vsel %vm334, %v846, 0.0
      %v970 = vadd.f32 %v968, %v969
      %v971 = vsel %vm334, %v879, 0.0
      %v972 = vadd.f32 %v970, %v971
      %v973 = vsel %vm334, %v781, 0.0
      %v974 = vsel %vm334, %v814, 0.0
      %v975 = vadd.f32 %v973, %v974
      %v976 = vsel %vm334, %v847, 0.0
      %v977 = vadd.f32 %v975, %v976
      %v978 = vsel %vm334, %v880, 0.0
      %v979 = vadd.f32 %v977, %v978
      %v980 = vsel %vm334, %v782, 0.0
      %v981 = vsel %vm334, %v815, 0.0
      %v982 = vadd.f32 %v980, %v981
      %v983 = vsel %vm334, %v848, 0.0
      %v984 = vadd.f32 %v982, %v983
      %v985 = vsel %vm334, %v881, 0.0
      %v986 = vadd.f32 %v984, %v985
      %v987 = vsel %vm334, %v783, 0.0
      %v988 = vsel %vm334, %v816, 0.0
      %v989 = vadd.f32 %v987, %v988
      %v990 = vsel %vm334, %v849, 0.0
      %v991 = vadd.f32 %v989, %v990
      %v992 = vsel %vm334, %v882, 0.0
      %v993 = vadd.f32 %v991, %v992
      %v994 = vsel %vm334, %v784, 0.0
      %v995 = vsel %vm334, %v817, 0.0
      %v996 = vadd.f32 %v994, %v995
      %v997 = vsel %vm334, %v850, 0.0
      %v998 = vadd.f32 %v996, %v997
      %v999 = vsel %vm334, %v883, 0.0
      %v1000 = vadd.f32 %v998, %v999
      %v1001 = vsel %vm334, %v785, 0.0
      %v1002 = vsel %vm334, %v818, 0.0
      %v1003 = vadd.f32 %v1001, %v1002
      %v1004 = vsel %vm334, %v851, 0.0
      %v1005 = vadd.f32 %v1003, %v1004
      %v1006 = vsel %vm334, %v884, 0.0
      %v1007 = vadd.f32 %v1005, %v1006
      %v1008 = vsel %vm334, %v786, 0.0
      %v1009 = vsel %vm334, %v819, 0.0
      %v1010 = vadd.f32 %v1008, %v1009
      %v1011 = vsel %vm334, %v852, 0.0
      %v1012 = vadd.f32 %v1010, %v1011
      %v1013 = vsel %vm334, %v885, 0.0
      %v1014 = vadd.f32 %v1012, %v1013
      %v1015 = vsel %vm334, %v787, 0.0
      %v1016 = vsel %vm334, %v820, 0.0
      %v1017 = vadd.f32 %v1015, %v1016
      %v1018 = vsel %vm334, %v853, 0.0
      %v1019 = vadd.f32 %v1017, %v1018
      %v1020 = vsel %vm334, %v886, 0.0
      %v1021 = vadd.f32 %v1019, %v1020
      %v1022 = vsel %vm334, %v788, 0.0
      %v1023 = vsel %vm334, %v821, 0.0
      %v1024 = vadd.f32 %v1022, %v1023
      %v1025 = vsel %vm334, %v854, 0.0
      %v1026 = vadd.f32 %v1024, %v1025
      %v1027 = vsel %vm334, %v887, 0.0
      %v1028 = vadd.f32 %v1026, %v1027
      %v1029 = vsel %vm334, %v789, 0.0
      %v1030 = vsel %vm334, %v822, 0.0
      %v1031 = vadd.f32 %v1029, %v1030
      %v1032 = vsel %vm334, %v855, 0.0
      %v1033 = vadd.f32 %v1031, %v1032
      %v1034 = vsel %vm334, %v888, 0.0
      %v1035 = vadd.f32 %v1033, %v1034
      %v1036 = vsel %vm334, %v790, 0.0
      %v1037 = vsel %vm334, %v823, 0.0
      %v1038 = vadd.f32 %v1036, %v1037
      %v1039 = vsel %vm334, %v856, 0.0
      %v1040 = vadd.f32 %v1038, %v1039
      %v1041 = vsel %vm334, %v889, 0.0
      %v1042 = vadd.f32 %v1040, %v1041
      %v1043 = vsel %vm334, %v791, 0.0
      %v1044 = vsel %vm334, %v824, 0.0
      %v1045 = vadd.f32 %v1043, %v1044
      %v1046 = vsel %vm334, %v857, 0.0
      %v1047 = vadd.f32 %v1045, %v1046
      %v1048 = vsel %vm334, %v890, 0.0
      %v1049 = vadd.f32 %v1047, %v1048
      %v1050 = vsel %vm334, %v792, 0.0
      %v1051 = vsel %vm334, %v825, 0.0
      %v1052 = vadd.f32 %v1050, %v1051
      %v1053 = vsel %vm334, %v858, 0.0
      %v1054 = vadd.f32 %v1052, %v1053
      %v1055 = vsel %vm334, %v891, 0.0
      %v1056 = vadd.f32 %v1054, %v1055
      %v1057 = vsel %vm334, %v793, 0.0
      %v1058 = vsel %vm334, %v826, 0.0
      %v1059 = vadd.f32 %v1057, %v1058
      %v1060 = vsel %vm334, %v859, 0.0
      %v1061 = vadd.f32 %v1059, %v1060
      %v1062 = vsel %vm334, %v892, 0.0
      %v1063 = vadd.f32 %v1061, %v1062
      %v1064 = vsel %vm334, %v794, 0.0
      %v1065 = vsel %vm334, %v827, 0.0
      %v1066 = vadd.f32 %v1064, %v1065
      %v1067 = vsel %vm334, %v860, 0.0
      %v1068 = vadd.f32 %v1066, %v1067
      %v1069 = vsel %vm334, %v893, 0.0
      %v1070 = vadd.f32 %v1068, %v1069
      %v1071 = vsel %vm334, %v795, 0.0
      %v1072 = vsel %vm334, %v828, 0.0
      %v1073 = vadd.f32 %v1071, %v1072
      %v1074 = vsel %vm334, %v861, 0.0
      %v1075 = vadd.f32 %v1073, %v1074
      %v1076 = vsel %vm334, %v894, 0.0
      %v1077 = vadd.f32 %v1075, %v1076
      %v1078 = vsel %vm334, %v796, 0.0
      %v1079 = vsel %vm334, %v829, 0.0
      %v1080 = vadd.f32 %v1078, %v1079
      %v1081 = vsel %vm334, %v862, 0.0
      %v1082 = vadd.f32 %v1080, %v1081
      %v1083 = vsel %vm334, %v895, 0.0
      %v1084 = vadd.f32 %v1082, %v1083
      %v1085 = vsel %vm334, %v797, 0.0
      %v1086 = vsel %vm334, %v830, 0.0
      %v1087 = vadd.f32 %v1085, %v1086
      %v1088 = vsel %vm334, %v863, 0.0
      %v1089 = vadd.f32 %v1087, %v1088
      %v1090 = vsel %vm334, %v896, 0.0
      %v1091 = vadd.f32 %v1089, %v1090
      %v1092 = vsel %vm334, %v798, 0.0
      %v1093 = vsel %vm334, %v831, 0.0
      %v1094 = vadd.f32 %v1092, %v1093
      %v1095 = vsel %vm334, %v864, 0.0
      %v1096 = vadd.f32 %v1094, %v1095
      %v1097 = vsel %vm334, %v897, 0.0
      %v1098 = vadd.f32 %v1096, %v1097
      %v1099 = vsel %vm334, %v799, 0.0
      %v1100 = vsel %vm334, %v832, 0.0
      %v1101 = vadd.f32 %v1099, %v1100
      %v1102 = vsel %vm334, %v865, 0.0
      %v1103 = vadd.f32 %v1101, %v1102
      %v1104 = vsel %vm334, %v898, 0.0
      %v1105 = vadd.f32 %v1103, %v1104
      %v1106 = vsel %vm334, %v800, 0.0
      %v1107 = vsel %vm334, %v833, 0.0
      %v1108 = vadd.f32 %v1106, %v1107
      %v1109 = vsel %vm334, %v866, 0.0
      %v1110 = vadd.f32 %v1108, %v1109
      %v1111 = vsel %vm334, %v899, 0.0
      %v1112 = vadd.f32 %v1110, %v1111
      %v1113 = vsel %vm334, %v801, 0.0
      %v1114 = vsel %vm334, %v834, 0.0
      %v1115 = vadd.f32 %v1113, %v1114
      %v1116 = vsel %vm334, %v867, 0.0
      %v1117 = vadd.f32 %v1115, %v1116
      %v1118 = vsel %vm334, %v900, 0.0
      %v1119 = vadd.f32 %v1117, %v1118
      %v1120 = vsel %vm334, %v802, 0.0
      %v1121 = vsel %vm334, %v835, 0.0
      %v1122 = vadd.f32 %v1120, %v1121
      %v1123 = vsel %vm334, %v868, 0.0
      %v1124 = vadd.f32 %v1122, %v1123
      %v1125 = vsel %vm334, %v901, 0.0
      %v1126 = vadd.f32 %v1124, %v1125
      %v1127 = vsel %vm559, %v803, 0.0
      %v1128 = vsel %vm559, %v836, 0.0
      %v1129 = vadd.f32 %v1127, %v1128
      %v1130 = vsel %vm559, %v869, 0.0
      %v1131 = vadd.f32 %v1129, %v1130
      %v1132 = vsel %vm559, %v902, 0.0
      %v1133 = vadd.f32 %v1131, %v1132
      %v1134 = vsel %vm334, %v909, 0.0
      %v1135 = vsel %vm334, %v916, 0.0
      %v1136 = vadd.f32 %v1134, %v1135
      %v1137 = vsel %vm334, %v923, 0.0
      %v1138 = vadd.f32 %v1136, %v1137
      %v1139 = vsel %vm334, %v930, 0.0
      %v1140 = vadd.f32 %v1138, %v1139
      %v1141 = vsel %vm334, %v937, 0.0
      %v1142 = vadd.f32 %v1140, %v1141
      %v1143 = vsel %vm334, %v944, 0.0
      %v1144 = vadd.f32 %v1142, %v1143
      %v1145 = vsel %vm334, %v951, 0.0
      %v1146 = vadd.f32 %v1144, %v1145
      %v1147 = vsel %vm334, %v958, 0.0
      %v1148 = vadd.f32 %v1146, %v1147
      %v1149 = vsel %vm334, %v965, 0.0
      %v1150 = vadd.f32 %v1148, %v1149
      %v1151 = vsel %vm334, %v972, 0.0
      %v1152 = vadd.f32 %v1150, %v1151
      %v1153 = vsel %vm334, %v979, 0.0
      %v1154 = vadd.f32 %v1152, %v1153
      %v1155 = vsel %vm334, %v986, 0.0
      %v1156 = vadd.f32 %v1154, %v1155
      %v1157 = vsel %vm334, %v993, 0.0
      %v1158 = vadd.f32 %v1156, %v1157
      %v1159 = vsel %vm334, %v1000, 0.0
      %v1160 = vadd.f32 %v1158, %v1159
      %v1161 = vsel %vm334, %v1007, 0.0
      %v1162 = vadd.f32 %v1160, %v1161
      %v1163 = vsel %vm334, %v1014, 0.0
      %v1164 = vadd.f32 %v1162, %v1163
      %v1165 = vsel %vm334, %v1021, 0.0
      %v1166 = vadd.f32 %v1164, %v1165
      %v1167 = vsel %vm334, %v1028, 0.0
      %v1168 = vadd.f32 %v1166, %v1167
      %v1169 = vsel %vm334, %v1035, 0.0
      %v1170 = vadd.f32 %v1168, %v1169
      %v1171 = vsel %vm334, %v1042, 0.0
      %v1172 = vadd.f32 %v1170, %v1171
      %v1173 = vsel %vm334, %v1049, 0.0
      %v1174 = vadd.f32 %v1172, %v1173
      %v1175 = vsel %vm334, %v1056, 0.0
      %v1176 = vadd.f32 %v1174, %v1175
      %v1177 = vsel %vm334, %v1063, 0.0
      %v1178 = vadd.f32 %v1176, %v1177
      %v1179 = vsel %vm334, %v1070, 0.0
      %v1180 = vadd.f32 %v1178, %v1179
      %v1181 = vsel %vm334, %v1077, 0.0
      %v1182 = vadd.f32 %v1180, %v1181
      %v1183 = vsel %vm334, %v1084, 0.0
      %v1184 = vadd.f32 %v1182, %v1183
      %v1185 = vsel %vm334, %v1091, 0.0
      %v1186 = vadd.f32 %v1184, %v1185
      %v1187 = vsel %vm334, %v1098, 0.0
      %v1188 = vadd.f32 %v1186, %v1187
      %v1189 = vsel %vm334, %v1105, 0.0
      %v1190 = vadd.f32 %v1188, %v1189
      %v1191 = vsel %vm334, %v1112, 0.0
      %v1192 = vadd.f32 %v1190, %v1191
      %v1193 = vsel %vm334, %v1119, 0.0
      %v1194 = vadd.f32 %v1192, %v1193
      %v1195 = vsel %vm334, %v1126, 0.0
      %v1196 = vadd.f32 %v1194, %v1195
      %v1197 = vsel %vm559, %v1133, 0.0
      %v1198 = vadd.f32 %v1196, %v1197
      %v1199 = vrot.slane %v1198, 4
      %v1200 = vadd.f32 %v1198, %v1199
      %v1201 = vrot.slane %v1200, 2
      %v1202 = vadd.f32 %v1200, %v1201
      %v1203 = vrot.slane %v1202, 1
      %v1204 = vadd.f32 %v1202, %v1203
      %v1205 = vmul.f32 %v1204, 0.00097276265
      %v1206 = vadd.f32 %v1205, 1e-05
      %v1207 = vrsqrt.pop %v1206
      %v1208 = vld [vmem:[%s1] sm:$0xff]
      %v1209 = vld [vmem:[%s1 + $0x8] sm:$0xff]
      %v1210 = vld [vmem:[%s1 + $0x10] sm:$0xff]
      %v1211 = vld [vmem:[%s1 + $0x18] sm:$0xff]
      %v1212 = vld [vmem:[%s1 + $0x20] sm:$0xff]
      %v1213 = vld [vmem:[%s1 + $0x28] sm:$0xff]
      %v1214 = vld [vmem:[%s1 + $0x30] sm:$0xff]
      %v1215 = vld [vmem:[%s1 + $0x38] sm:$0xff]
      %v1216 = vld [vmem:[%s1 + $0x40] sm:$0xff]
      %v1217 = vld [vmem:[%s1 + $0x48] sm:$0xff]
      %v1218 = vld [vmem:[%s1 + $0x50] sm:$0xff]
      %v1219 = vld [vmem:[%s1 + $0x58] sm:$0xff]
      %v1220 = vld [vmem:[%s1 + $0x60] sm:$0xff]
      %v1221 = vld [vmem:[%s1 + $0x68] sm:$0xff]
      %v1222 = vld [vmem:[%s1 + $0x70] sm:$0xff]
      %v1223 = vld [vmem:[%s1 + $0x78] sm:$0xff]
      %v1224 = vld [vmem:[%s1 + $0x80] sm:$0xff]
      %v1225 = vld [vmem:[%s1 + $0x88] sm:$0xff]
      %v1226 = vld [vmem:[%s1 + $0x90] sm:$0xff]
      %v1227 = vld [vmem:[%s1 + $0x98] sm:$0xff]
      %v1228 = vld [vmem:[%s1 + $0xa0] sm:$0xff]
      %v1229 = vld [vmem:[%s1 + $0xa8] sm:$0xff]
      %v1230 = vld [vmem:[%s1 + $0xb0] sm:$0xff]
      %v1231 = vld [vmem:[%s1 + $0xb8] sm:$0xff]
      %v1232 = vld [vmem:[%s1 + $0xc0] sm:$0xff]
      %v1233 = vld [vmem:[%s1 + $0xc8] sm:$0xff]
      %v1234 = vld [vmem:[%s1 + $0xd0] sm:$0xff]
      %v1235 = vld [vmem:[%s1 + $0xd8] sm:$0xff]
      %v1236 = vld [vmem:[%s1 + $0xe0] sm:$0xff]
      %v1237 = vld [vmem:[%s1 + $0xe8] sm:$0xff]
      %v1238 = vld [vmem:[%s1 + $0xf0] sm:$0xff]
      %v1239 = vld [vmem:[%s1 + $0xf8] sm:$0xff]
      %v1240 = vld [vmem:[%s1 + $0x100] sm:$0x1]
      %v1241 = vld [vmem:[%s1 + $0x108] sm:$0xff]
      %v1242 = vld [vmem:[%s1 + $0x110] sm:$0xff]
      %v1243 = vld [vmem:[%s1 + $0x118] sm:$0xff]
      %v1244 = vld [vmem:[%s1 + $0x120] sm:$0xff]
      %v1245 = vld [vmem:[%s1 + $0x128] sm:$0xff]
      %v1246 = vld [vmem:[%s1 + $0x130] sm:$0xff]
      %v1247 = vld [vmem:[%s1 + $0x138] sm:$0xff]
      %v1248 = vld [vmem:[%s1 + $0x140] sm:$0xff]
      %v1249 = vld [vmem:[%s1 + $0x148] sm:$0xff]
      %v1250 = vld [vmem:[%s1 + $0x150] sm:$0xff]
      %v1251 = vld [vmem:[%s1 + $0x158] sm:$0xff]
      %v1252 = vld [vmem:[%s1 + $0x160] sm:$0xff]
      %v1253 = vld [vmem:[%s1 + $0x168] sm:$0xff]
      %v1254 = vld [vmem:[%s1 + $0x170] sm:$0xff]
      %v1255 = vld [vmem:[%s1 + $0x178] sm:$0xff]
      %v1256 = vld [vmem:[%s1 + $0x180] sm:$0xff]
      %v1257 = vld [vmem:[%s1 + $0x188] sm:$0xff]
      %v1258 = vld [vmem:[%s1 + $0x190] sm:$0xff]
      %v1259 = vld [vmem:[%s1 + $0x198] sm:$0xff]
      %v1260 = vld [vmem:[%s1 + $0x1a0] sm:$0xff]
      %v1261 = vld [vmem:[%s1 + $0x1a8] sm:$0xff]
      %v1262 = vld [vmem:[%s1 + $0x1b0] sm:$0xff]
      %v1263 = vld [vmem:[%s1 + $0x1b8] sm:$0xff]
      %v1264 = vld [vmem:[%s1 + $0x1c0] sm:$0xff]
      %v1265 = vld [vmem:[%s1 + $0x1c8] sm:$0xff]
      %v1266 = vld [vmem:[%s1 + $0x1d0] sm:$0xff]
      %v1267 = vld [vmem:[%s1 + $0x1d8] sm:$0xff]
      %v1268 = vld [vmem:[%s1 + $0x1e0] sm:$0xff]
      %v1269 = vld [vmem:[%s1 + $0x1e8] sm:$0xff]
      %v1270 = vld [vmem:[%s1 + $0x1f0] sm:$0xff]
      %v1271 = vld [vmem:[%s1 + $0x1f8] sm:$0xff]
      %v1272 = vld [vmem:[%s1 + $0x200] sm:$0xff]
      %v1273 = vld [vmem:[%s1 + $0x208] sm:$0x1]
      %v1274 = vld [vmem:[%s1 + $0x210] sm:$0xff]
      %v1275 = vld [vmem:[%s1 + $0x218] sm:$0xff]
      %v1276 = vld [vmem:[%s1 + $0x220] sm:$0xff]
      %v1277 = vld [vmem:[%s1 + $0x228] sm:$0xff]
      %v1278 = vld [vmem:[%s1 + $0x230] sm:$0xff]
      %v1279 = vld [vmem:[%s1 + $0x238] sm:$0xff]
      %v1280 = vld [vmem:[%s1 + $0x240] sm:$0xff]
      %v1281 = vld [vmem:[%s1 + $0x248] sm:$0xff]
      %v1282 = vld [vmem:[%s1 + $0x250] sm:$0xff]
      %v1283 = vld [vmem:[%s1 + $0x258] sm:$0xff]
      %v1284 = vld [vmem:[%s1 + $0x260] sm:$0xff]
      %v1285 = vld [vmem:[%s1 + $0x268] sm:$0xff]
      %v1286 = vld [vmem:[%s1 + $0x270] sm:$0xff]
      %v1287 = vld [vmem:[%s1 + $0x278] sm:$0xff]
      %v1288 = vld [vmem:[%s1 + $0x280] sm:$0xff]
      %v1289 = vld [vmem:[%s1 + $0x288] sm:$0xff]
      %v1290 = vld [vmem:[%s1 + $0x290] sm:$0xff]
      %v1291 = vld [vmem:[%s1 + $0x298] sm:$0xff]
      %v1292 = vld [vmem:[%s1 + $0x2a0] sm:$0xff]
      %v1293 = vld [vmem:[%s1 + $0x2a8] sm:$0xff]
      %v1294 = vld [vmem:[%s1 + $0x2b0] sm:$0xff]
      %v1295 = vld [vmem:[%s1 + $0x2b8] sm:$0xff]
      %v1296 = vld [vmem:[%s1 + $0x2c0] sm:$0xff]
      %v1297 = vld [vmem:[%s1 + $0x2c8] sm:$0xff]
      %v1298 = vld [vmem:[%s1 + $0x2d0] sm:$0xff]
      %v1299 = vld [vmem:[%s1 + $0x2d8] sm:$0xff]
      %v1300 = vld [vmem:[%s1 + $0x2e0] sm:$0xff]
      %v1301 = vld [vmem:[%s1 + $0x2e8] sm:$0xff]
      %v1302 = vld [vmem:[%s1 + $0x2f0] sm:$0xff]
      %v1303 = vld [vmem:[%s1 + $0x2f8] sm:$0xff]
      %v1304 = vld [vmem:[%s1 + $0x300] sm:$0xff]
      %v1305 = vld [vmem:[%s1 + $0x308] sm:$0xff]
      %v1306 = vld [vmem:[%s1 + $0x310] sm:$0x1]
      %v1307 = vld [vmem:[%s1 + $0x318] sm:$0xff]
      %v1308 = vld [vmem:[%s1 + $0x320] sm:$0xff]
      %v1309 = vld [vmem:[%s1 + $0x328] sm:$0xff]
      %v1310 = vld [vmem:[%s1 + $0x330] sm:$0xff]
      %v1311 = vld [vmem:[%s1 + $0x338] sm:$0xff]
      %v1312 = vld [vmem:[%s1 + $0x340] sm:$0xff]
      %v1313 = vld [vmem:[%s1 + $0x348] sm:$0xff]
      %v1314 = vld [vmem:[%s1 + $0x350] sm:$0xff]
      %v1315 = vld [vmem:[%s1 + $0x358] sm:$0xff]
      %v1316 = vld [vmem:[%s1 + $0x360] sm:$0xff]
      %v1317 = vld [vmem:[%s1 + $0x368] sm:$0xff]
      %v1318 = vld [vmem:[%s1 + $0x370] sm:$0xff]
      %v1319 = vld [vmem:[%s1 + $0x378] sm:$0xff]
      %v1320 = vld [vmem:[%s1 + $0x380] sm:$0xff]
      %v1321 = vld [vmem:[%s1 + $0x388] sm:$0xff]
      %v1322 = vld [vmem:[%s1 + $0x390] sm:$0xff]
      %v1323 = vld [vmem:[%s1 + $0x398] sm:$0xff]
      %v1324 = vld [vmem:[%s1 + $0x3a0] sm:$0xff]
      %v1325 = vld [vmem:[%s1 + $0x3a8] sm:$0xff]
      %v1326 = vld [vmem:[%s1 + $0x3b0] sm:$0xff]
      %v1327 = vld [vmem:[%s1 + $0x3b8] sm:$0xff]
      %v1328 = vld [vmem:[%s1 + $0x3c0] sm:$0xff]
      %v1329 = vld [vmem:[%s1 + $0x3c8] sm:$0xff]
      %v1330 = vld [vmem:[%s1 + $0x3d0] sm:$0xff]
      %v1331 = vld [vmem:[%s1 + $0x3d8] sm:$0xff]
      %v1332 = vld [vmem:[%s1 + $0x3e0] sm:$0xff]
      %v1333 = vld [vmem:[%s1 + $0x3e8] sm:$0xff]
      %v1334 = vld [vmem:[%s1 + $0x3f0] sm:$0xff]
      %v1335 = vld [vmem:[%s1 + $0x3f8] sm:$0xff]
      %v1336 = vld [vmem:[%s1 + $0x400] sm:$0xff]
      %v1337 = vld [vmem:[%s1 + $0x408] sm:$0xff]
      %v1338 = vld [vmem:[%s1 + $0x410] sm:$0xff]
      %v1339 = vld [vmem:[%s1 + $0x418] sm:$0x1]
      %v1340 = vld [vmem:[%s2] sm:$0xff]
      %v1341 = vld [vmem:[%s2 + $0x8] sm:$0xff]
      %v1342 = vld [vmem:[%s2 + $0x10] sm:$0xff]
      %v1343 = vld [vmem:[%s2 + $0x18] sm:$0xff]
      %v1344 = vld [vmem:[%s2 + $0x20] sm:$0xff]
      %v1345 = vld [vmem:[%s2 + $0x28] sm:$0xff]
      %v1346 = vld [vmem:[%s2 + $0x30] sm:$0xff]
      %v1347 = vld [vmem:[%s2 + $0x38] sm:$0xff]
      %v1348 = vld [vmem:[%s2 + $0x40] sm:$0xff]
      %v1349 = vld [vmem:[%s2 + $0x48] sm:$0xff]
      %v1350 = vld [vmem:[%s2 + $0x50] sm:$0xff]
      %v1351 = vld [vmem:[%s2 + $0x58] sm:$0xff]
      %v1352 = vld [vmem:[%s2 + $0x60] sm:$0xff]
      %v1353 = vld [vmem:[%s2 + $0x68] sm:$0xff]
      %v1354 = vld [vmem:[%s2 + $0x70] sm:$0xff]
      %v1355 = vld [vmem:[%s2 + $0x78] sm:$0xff]
      %v1356 = vld [vmem:[%s2 + $0x80] sm:$0xff]
      %v1357 = vld [vmem:[%s2 + $0x88] sm:$0xff]
      %v1358 = vld [vmem:[%s2 + $0x90] sm:$0xff]
      %v1359 = vld [vmem:[%s2 + $0x98] sm:$0xff]
      %v1360 = vld [vmem:[%s2 + $0xa0] sm:$0xff]
      %v1361 = vld [vmem:[%s2 + $0xa8] sm:$0xff]
      %v1362 = vld [vmem:[%s2 + $0xb0] sm:$0xff]
      %v1363 = vld [vmem:[%s2 + $0xb8] sm:$0xff]
      %v1364 = vld [vmem:[%s2 + $0xc0] sm:$0xff]
      %v1365 = vld [vmem:[%s2 + $0xc8] sm:$0xff]
      %v1366 = vld [vmem:[%s2 + $0xd0] sm:$0xff]
      %v1367 = vld [vmem:[%s2 + $0xd8] sm:$0xff]
      %v1368 = vld [vmem:[%s2 + $0xe0] sm:$0xff]
      %v1369 = vld [vmem:[%s2 + $0xe8] sm:$0xff]
      %v1370 = vld [vmem:[%s2 + $0xf0] sm:$0xff]
      %v1371 = vld [vmem:[%s2 + $0xf8] sm:$0xff]
      %v1372 = vld [vmem:[%s2 + $0x100] sm:$0x1]
      %v1373 = vld [vmem:[%s2 + $0x108] sm:$0xff]
      %v1374 = vld [vmem:[%s2 + $0x110] sm:$0xff]
      %v1375 = vld [vmem:[%s2 + $0x118] sm:$0xff]
      %v1376 = vld [vmem:[%s2 + $0x120] sm:$0xff]
      %v1377 = vld [vmem:[%s2 + $0x128] sm:$0xff]
      %v1378 = vld [vmem:[%s2 + $0x130] sm:$0xff]
      %v1379 = vld [vmem:[%s2 + $0x138] sm:$0xff]
      %v1380 = vld [vmem:[%s2 + $0x140] sm:$0xff]
      %v1381 = vld [vmem:[%s2 + $0x148] sm:$0xff]
      %v1382 = vld [vmem:[%s2 + $0x150] sm:$0xff]
      %v1383 = vld [vmem:[%s2 + $0x158] sm:$0xff]
      %v1384 = vld [vmem:[%s2 + $0x160] sm:$0xff]
      %v1385 = vld [vmem:[%s2 + $0x168] sm:$0xff]
      %v1386 = vld [vmem:[%s2 + $0x170] sm:$0xff]
      %v1387 = vld [vmem:[%s2 + $0x178] sm:$0xff]
      %v1388 = vld [vmem:[%s2 + $0x180] sm:$0xff]
      %v1389 = vld [vmem:[%s2 + $0x188] sm:$0xff]
      %v1390 = vld [vmem:[%s2 + $0x190] sm:$0xff]
      %v1391 = vld [vmem:[%s2 + $0x198] sm:$0xff]
      %v1392 = vld [vmem:[%s2 + $0x1a0] sm:$0xff]
      %v1393 = vld [vmem:[%s2 + $0x1a8] sm:$0xff]
      %v1394 = vld [vmem:[%s2 + $0x1b0] sm:$0xff]
      %v1395 = vld [vmem:[%s2 + $0x1b8] sm:$0xff]
      %v1396 = vld [vmem:[%s2 + $0x1c0] sm:$0xff]
      %v1397 = vld [vmem:[%s2 + $0x1c8] sm:$0xff]
      %v1398 = vld [vmem:[%s2 + $0x1d0] sm:$0xff]
      %v1399 = vld [vmem:[%s2 + $0x1d8] sm:$0xff]
      %v1400 = vld [vmem:[%s2 + $0x1e0] sm:$0xff]
      %v1401 = vld [vmem:[%s2 + $0x1e8] sm:$0xff]
      %v1402 = vld [vmem:[%s2 + $0x1f0] sm:$0xff]
      %v1403 = vld [vmem:[%s2 + $0x1f8] sm:$0xff]
      %v1404 = vld [vmem:[%s2 + $0x200] sm:$0xff]
      %v1405 = vld [vmem:[%s2 + $0x208] sm:$0x1]
      %v1406 = vld [vmem:[%s2 + $0x210] sm:$0xff]
      %v1407 = vld [vmem:[%s2 + $0x218] sm:$0xff]
      %v1408 = vld [vmem:[%s2 + $0x220] sm:$0xff]
      %v1409 = vld [vmem:[%s2 + $0x228] sm:$0xff]
      %v1410 = vld [vmem:[%s2 + $0x230] sm:$0xff]
      %v1411 = vld [vmem:[%s2 + $0x238] sm:$0xff]
      %v1412 = vld [vmem:[%s2 + $0x240] sm:$0xff]
      %v1413 = vld [vmem:[%s2 + $0x248] sm:$0xff]
      %v1414 = vld [vmem:[%s2 + $0x250] sm:$0xff]
      %v1415 = vld [vmem:[%s2 + $0x258] sm:$0xff]
      %v1416 = vld [vmem:[%s2 + $0x260] sm:$0xff]
      %v1417 = vld [vmem:[%s2 + $0x268] sm:$0xff]
      %v1418 = vld [vmem:[%s2 + $0x270] sm:$0xff]
      %v1419 = vld [vmem:[%s2 + $0x278] sm:$0xff]
      %v1420 = vld [vmem:[%s2 + $0x280] sm:$0xff]
      %v1421 = vld [vmem:[%s2 + $0x288] sm:$0xff]
      %v1422 = vld [vmem:[%s2 + $0x290] sm:$0xff]
      %v1423 = vld [vmem:[%s2 + $0x298] sm:$0xff]
      %v1424 = vld [vmem:[%s2 + $0x2a0] sm:$0xff]
      %v1425 = vld [vmem:[%s2 + $0x2a8] sm:$0xff]
      %v1426 = vld [vmem:[%s2 + $0x2b0] sm:$0xff]
      %v1427 = vld [vmem:[%s2 + $0x2b8] sm:$0xff]
      %v1428 = vld [vmem:[%s2 + $0x2c0] sm:$0xff]
      %v1429 = vld [vmem:[%s2 + $0x2c8] sm:$0xff]
      %v1430 = vld [vmem:[%s2 + $0x2d0] sm:$0xff]
      %v1431 = vld [vmem:[%s2 + $0x2d8] sm:$0xff]
      %v1432 = vld [vmem:[%s2 + $0x2e0] sm:$0xff]
      %v1433 = vld [vmem:[%s2 + $0x2e8] sm:$0xff]
      %v1434 = vld [vmem:[%s2 + $0x2f0] sm:$0xff]
      %v1435 = vld [vmem:[%s2 + $0x2f8] sm:$0xff]
      %v1436 = vld [vmem:[%s2 + $0x300] sm:$0xff]
      %v1437 = vld [vmem:[%s2 + $0x308] sm:$0xff]
      %v1438 = vld [vmem:[%s2 + $0x310] sm:$0x1]
      %v1439 = vld [vmem:[%s2 + $0x318] sm:$0xff]
      %v1440 = vld [vmem:[%s2 + $0x320] sm:$0xff]
      %v1441 = vld [vmem:[%s2 + $0x328] sm:$0xff]
      %v1442 = vld [vmem:[%s2 + $0x330] sm:$0xff]
      %v1443 = vld [vmem:[%s2 + $0x338] sm:$0xff]
      %v1444 = vld [vmem:[%s2 + $0x340] sm:$0xff]
      %v1445 = vld [vmem:[%s2 + $0x348] sm:$0xff]
      %v1446 = vld [vmem:[%s2 + $0x350] sm:$0xff]
      %v1447 = vld [vmem:[%s2 + $0x358] sm:$0xff]
      %v1448 = vld [vmem:[%s2 + $0x360] sm:$0xff]
      %v1449 = vld [vmem:[%s2 + $0x368] sm:$0xff]
      %v1450 = vld [vmem:[%s2 + $0x370] sm:$0xff]
      %v1451 = vld [vmem:[%s2 + $0x378] sm:$0xff]
      %v1452 = vld [vmem:[%s2 + $0x380] sm:$0xff]
      %v1453 = vld [vmem:[%s2 + $0x388] sm:$0xff]
      %v1454 = vld [vmem:[%s2 + $0x390] sm:$0xff]
      %v1455 = vld [vmem:[%s2 + $0x398] sm:$0xff]
      %v1456 = vld [vmem:[%s2 + $0x3a0] sm:$0xff]
      %v1457 = vld [vmem:[%s2 + $0x3a8] sm:$0xff]
      %v1458 = vld [vmem:[%s2 + $0x3b0] sm:$0xff]
      %v1459 = vld [vmem:[%s2 + $0x3b8] sm:$0xff]
      %v1460 = vld [vmem:[%s2 + $0x3c0] sm:$0xff]
      %v1461 = vld [vmem:[%s2 + $0x3c8] sm:$0xff]
      %v1462 = vld [vmem:[%s2 + $0x3d0] sm:$0xff]
      %v1463 = vld [vmem:[%s2 + $0x3d8] sm:$0xff]
      %v1464 = vld [vmem:[%s2 + $0x3e0] sm:$0xff]
      %v1465 = vld [vmem:[%s2 + $0x3e8] sm:$0xff]
      %v1466 = vld [vmem:[%s2 + $0x3f0] sm:$0xff]
      %v1467 = vld [vmem:[%s2 + $0x3f8] sm:$0xff]
      %v1468 = vld [vmem:[%s2 + $0x400] sm:$0xff]
      %v1469 = vld [vmem:[%s2 + $0x408] sm:$0xff]
      %v1470 = vld [vmem:[%s2 + $0x410] sm:$0xff]
      %v1471 = vld [vmem:[%s2 + $0x418] sm:$0x1]
      %v1472 = vmul.f32 %v639, %v1207
      %v1473 = vmul.f32 %v640, %v1207
      %v1474 = vmul.f32 %v641, %v1207
      %v1475 = vmul.f32 %v642, %v1207
      %v1476 = vmul.f32 %v643, %v1207
      %v1477 = vmul.f32 %v644, %v1207
      %v1478 = vmul.f32 %v645, %v1207
      %v1479 = vmul.f32 %v646, %v1207
      %v1480 = vmul.f32 %v647, %v1207
      %v1481 = vmul.f32 %v648, %v1207
      %v1482 = vmul.f32 %v649, %v1207
      %v1483 = vmul.f32 %v650, %v1207
      %v1484 = vmul.f32 %v651, %v1207
      %v1485 = vmul.f32 %v652, %v1207
      %v1486 = vmul.f32 %v653, %v1207
      %v1487 = vmul.f32 %v654, %v1207
      %v1488 = vmul.f32 %v655, %v1207
      %v1489 = vmul.f32 %v656, %v1207
      %v1490 = vmul.f32 %v657, %v1207
      %v1491 = vmul.f32 %v658, %v1207
      %v1492 = vmul.f32 %v659, %v1207
      %v1493 = vmul.f32 %v660, %v1207
      %v1494 = vmul.f32 %v661, %v1207
      %v1495 = vmul.f32 %v662, %v1207
      %v1496 = vmul.f32 %v663, %v1207
      %v1497 = vmul.f32 %v664, %v1207
      %v1498 = vmul.f32 %v665, %v1207
      %v1499 = vmul.f32 %v666, %v1207
      %v1500 = vmul.f32 %v667, %v1207
      %v1501 = vmul.f32 %v668, %v1207
      %v1502 = vmul.f32 %v669, %v1207
      %v1503 = vmul.f32 %v670, %v1207
      %v1504 = vmul.f32 %v671, %v1207
      %v1505 = vmul.f32 %v672, %v1207
      %v1506 = vmul.f32 %v673, %v1207
      %v1507 = vmul.f32 %v674, %v1207
      %v1508 = vmul.f32 %v675, %v1207
      %v1509 = vmul.f32 %v676, %v1207
      %v1510 = vmul.f32 %v677, %v1207
      %v1511 = vmul.f32 %v678, %v1207
      %v1512 = vmul.f32 %v679, %v1207
      %v1513 = vmul.f32 %v680, %v1207
      %v1514 = vmul.f32 %v681, %v1207
      %v1515 = vmul.f32 %v682, %v1207
      %v1516 = vmul.f32 %v683, %v1207
      %v1517 = vmul.f32 %v684, %v1207
      %v1518 = vmul.f32 %v685, %v1207
      %v1519 = vmul.f32 %v686, %v1207
      %v1520 = vmul.f32 %v687, %v1207
      %v1521 = vmul.f32 %v688, %v1207
      %v1522 = vmul.f32 %v689, %v1207
      %v1523 = vmul.f32 %v690, %v1207
      %v1524 = vmul.f32 %v691, %v1207
      %v1525 = vmul.f32 %v692, %v1207
      %v1526 = vmul.f32 %v693, %v1207
      %v1527 = vmul.f32 %v694, %v1207
      %v1528 = vmul.f32 %v695, %v1207
      %v1529 = vmul.f32 %v696, %v1207
      %v1530 = vmul.f32 %v697, %v1207
      %v1531 = vmul.f32 %v698, %v1207
      %v1532 = vmul.f32 %v699, %v1207
      %v1533 = vmul.f32 %v700, %v1207
      %v1534 = vmul.f32 %v701, %v1207
      %v1535 = vmul.f32 %v702, %v1207
      %v1536 = vmul.f32 %v703, %v1207
      %v1537 = vmul.f32 %v704, %v1207
      %v1538 = vmul.f32 %v705, %v1207
      %v1539 = vmul.f32 %v706, %v1207
      %v1540 = vmul.f32 %v707, %v1207
      %v1541 = vmul.f32 %v708, %v1207
      %v1542 = vmul.f32 %v709, %v1207
      %v1543 = vmul.f32 %v710, %v1207
      %v1544 = vmul.f32 %v711, %v1207
      %v1545 = vmul.f32 %v712, %v1207
      %v1546 = vmul.f32 %v713, %v1207
      %v1547 = vmul.f32 %v714, %v1207
      %v1548 = vmul.f32 %v715, %v1207
      %v1549 = vmul.f32 %v716, %v1207
      %v1550 = vmul.f32 %v717, %v1207
      %v1551 = vmul.f32 %v718, %v1207
      %v1552 = vmul.f32 %v719, %v1207
      %v1553 = vmul.f32 %v720, %v1207
      %v1554 = vmul.f32 %v721, %v1207
      %v1555 = vmul.f32 %v722, %v1207
      %v1556 = vmul.f32 %v723, %v1207
      %v1557 = vmul.f32 %v724, %v1207
      %v1558 = vmul.f32 %v725, %v1207
      %v1559 = vmul.f32 %v726, %v1207
      %v1560 = vmul.f32 %v727, %v1207
      %v1561 = vmul.f32 %v728, %v1207
      %v1562 = vmul.f32 %v729, %v1207
      %v1563 = vmul.f32 %v730, %v1207
      %v1564 = vmul.f32 %v731, %v1207
      %v1565 = vmul.f32 %v732, %v1207
      %v1566 = vmul.f32 %v733, %v1207
      %v1567 = vmul.f32 %v734, %v1207
      %v1568 = vmul.f32 %v735, %v1207
      %v1569 = vmul.f32 %v736, %v1207
      %v1570 = vmul.f32 %v737, %v1207
      %v1571 = vmul.f32 %v738, %v1207
      %v1572 = vmul.f32 %v739, %v1207
      %v1573 = vmul.f32 %v740, %v1207
      %v1574 = vmul.f32 %v741, %v1207
      %v1575 = vmul.f32 %v742, %v1207
      %v1576 = vmul.f32 %v743, %v1207
      %v1577 = vmul.f32 %v744, %v1207
      %v1578 = vmul.f32 %v745, %v1207
      %v1579 = vmul.f32 %v746, %v1207
      %v1580 = vmul.f32 %v747, %v1207
      %v1581 = vmul.f32 %v748, %v1207
      %v1582 = vmul.f32 %v749, %v1207
      %v1583 = vmul.f32 %v750, %v1207
      %v1584 = vmul.f32 %v751, %v1207
      %v1585 = vmul.f32 %v752, %v1207
      %v1586 = vmul.f32 %v753, %v1207
      %v1587 = vmul.f32 %v754, %v1207
      %v1588 = vmul.f32 %v755, %v1207
      %v1589 = vmul.f32 %v756, %v1207
      %v1590 = vmul.f32 %v757, %v1207
      %v1591 = vmul.f32 %v758, %v1207
      %v1592 = vmul.f32 %v759, %v1207
      %v1593 = vmul.f32 %v760, %v1207
      %v1594 = vmul.f32 %v761, %v1207
      %v1595 = vmul.f32 %v762, %v1207
      %v1596 = vmul.f32 %v763, %v1207
      %v1597 = vmul.f32 %v764, %v1207
      %v1598 = vmul.f32 %v765, %v1207
      %v1599 = vmul.f32 %v766, %v1207
      %v1600 = vmul.f32 %v767, %v1207
      %v1601 = vmul.f32 %v768, %v1207
      %v1602 = vmul.f32 %v769, %v1207
      %v1603 = vmul.f32 %v770, %v1207
      %1605 = vset.pattern.permute.xlu0 0
      %1606 = vperm.xlu0 %1605, %v1208
      %v1607 = vpop.permute.xlu0 %1606
      %1610 = vset.pattern.permute.xlu0 0
      %1611 = vperm.xlu0 %1610, %v1209
      %v1612 = vpop.permute.xlu0 %1611
      %1615 = vset.pattern.permute.xlu0 0
      %1616 = vperm.xlu0 %1615, %v1210
      %v1617 = vpop.permute.xlu0 %1616
      %1620 = vset.pattern.permute.xlu0 0
      %1621 = vperm.xlu0 %1620, %v1211
      %v1622 = vpop.permute.xlu0 %1621
      %1625 = vset.pattern.permute.xlu0 0
      %1626 = vperm.xlu0 %1625, %v1212
      %v1627 = vpop.permute.xlu0 %1626
      %1630 = vset.pattern.permute.xlu0 0
      %1631 = vperm.xlu0 %1630, %v1213
      %v1632 = vpop.permute.xlu0 %1631
      %1635 = vset.pattern.permute.xlu0 0
      %1636 = vperm.xlu0 %1635, %v1214
      %v1637 = vpop.permute.xlu0 %1636
      %1640 = vset.pattern.permute.xlu0 0
      %1641 = vperm.xlu0 %1640, %v1215
      %v1642 = vpop.permute.xlu0 %1641
      %1645 = vset.pattern.permute.xlu0 0
      %1646 = vperm.xlu0 %1645, %v1216
      %v1647 = vpop.permute.xlu0 %1646
      %1650 = vset.pattern.permute.xlu0 0
      %1651 = vperm.xlu0 %1650, %v1217
      %v1652 = vpop.permute.xlu0 %1651
      %1655 = vset.pattern.permute.xlu0 0
      %1656 = vperm.xlu0 %1655, %v1218
      %v1657 = vpop.permute.xlu0 %1656
      %1660 = vset.pattern.permute.xlu0 0
      %1661 = vperm.xlu0 %1660, %v1219
      %v1662 = vpop.permute.xlu0 %1661
      %1665 = vset.pattern.permute.xlu0 0
      %1666 = vperm.xlu0 %1665, %v1220
      %v1667 = vpop.permute.xlu0 %1666
      %1670 = vset.pattern.permute.xlu0 0
      %1671 = vperm.xlu0 %1670, %v1221
      %v1672 = vpop.permute.xlu0 %1671
      %1675 = vset.pattern.permute.xlu0 0
      %1676 = vperm.xlu0 %1675, %v1222
      %v1677 = vpop.permute.xlu0 %1676
      %1680 = vset.pattern.permute.xlu0 0
      %1681 = vperm.xlu0 %1680, %v1223
      %v1682 = vpop.permute.xlu0 %1681
      %1685 = vset.pattern.permute.xlu0 0
      %1686 = vperm.xlu0 %1685, %v1224
      %v1687 = vpop.permute.xlu0 %1686
      %1690 = vset.pattern.permute.xlu0 0
      %1691 = vperm.xlu0 %1690, %v1225
      %v1692 = vpop.permute.xlu0 %1691
      %1695 = vset.pattern.permute.xlu0 0
      %1696 = vperm.xlu0 %1695, %v1226
      %v1697 = vpop.permute.xlu0 %1696
      %1700 = vset.pattern.permute.xlu0 0
      %1701 = vperm.xlu0 %1700, %v1227
      %v1702 = vpop.permute.xlu0 %1701
      %1705 = vset.pattern.permute.xlu0 0
      %1706 = vperm.xlu0 %1705, %v1228
      %v1707 = vpop.permute.xlu0 %1706
      %1710 = vset.pattern.permute.xlu0 0
      %1711 = vperm.xlu0 %1710, %v1229
      %v1712 = vpop.permute.xlu0 %1711
      %1715 = vset.pattern.permute.xlu0 0
      %1716 = vperm.xlu0 %1715, %v1230
      %v1717 = vpop.permute.xlu0 %1716
      %1720 = vset.pattern.permute.xlu0 0
      %1721 = vperm.xlu0 %1720, %v1231
      %v1722 = vpop.permute.xlu0 %1721
      %1725 = vset.pattern.permute.xlu0 0
      %1726 = vperm.xlu0 %1725, %v1232
      %v1727 = vpop.permute.xlu0 %1726
      %1730 = vset.pattern.permute.xlu0 0
      %1731 = vperm.xlu0 %1730, %v1233
      %v1732 = vpop.permute.xlu0 %1731
      %1735 = vset.pattern.permute.xlu0 0
      %1736 = vperm.xlu0 %1735, %v1234
      %v1737 = vpop.permute.xlu0 %1736
      %1740 = vset.pattern.permute.xlu0 0
      %1741 = vperm.xlu0 %1740, %v1235
      %v1742 = vpop.permute.xlu0 %1741
      %1745 = vset.pattern.permute.xlu0 0
      %1746 = vperm.xlu0 %1745, %v1236
      %v1747 = vpop.permute.xlu0 %1746
      %1750 = vset.pattern.permute.xlu0 0
      %1751 = vperm.xlu0 %1750, %v1237
      %v1752 = vpop.permute.xlu0 %1751
      %1755 = vset.pattern.permute.xlu0 0
      %1756 = vperm.xlu0 %1755, %v1238
      %v1757 = vpop.permute.xlu0 %1756
      %1760 = vset.pattern.permute.xlu0 0
      %1761 = vperm.xlu0 %1760, %v1239
      %v1762 = vpop.permute.xlu0 %1761
      %1765 = vset.pattern.permute.xlu0 0
      %1766 = vperm.xlu0 %1765, %v1240
      %v1767 = vpop.permute.xlu0 %1766
      %1770 = vset.pattern.permute.xlu0 0
      %1771 = vperm.xlu0 %1770, %v1241
      %v1772 = vpop.permute.xlu0 %1771
      %1775 = vset.pattern.permute.xlu0 0
      %1776 = vperm.xlu0 %1775, %v1242
      %v1777 = vpop.permute.xlu0 %1776
      %1780 = vset.pattern.permute.xlu0 0
      %1781 = vperm.xlu0 %1780, %v1243
      %v1782 = vpop.permute.xlu0 %1781
      %1785 = vset.pattern.permute.xlu0 0
      %1786 = vperm.xlu0 %1785, %v1244
      %v1787 = vpop.permute.xlu0 %1786
      %1790 = vset.pattern.permute.xlu0 0
      %1791 = vperm.xlu0 %1790, %v1245
      %v1792 = vpop.permute.xlu0 %1791
      %1795 = vset.pattern.permute.xlu0 0
      %1796 = vperm.xlu0 %1795, %v1246
      %v1797 = vpop.permute.xlu0 %1796
      %1800 = vset.pattern.permute.xlu0 0
      %1801 = vperm.xlu0 %1800, %v1247
      %v1802 = vpop.permute.xlu0 %1801
      %1805 = vset.pattern.permute.xlu0 0
      %1806 = vperm.xlu0 %1805, %v1248
      %v1807 = vpop.permute.xlu0 %1806
      %1810 = vset.pattern.permute.xlu0 0
      %1811 = vperm.xlu0 %1810, %v1249
      %v1812 = vpop.permute.xlu0 %1811
      %1815 = vset.pattern.permute.xlu0 0
      %1816 = vperm.xlu0 %1815, %v1250
      %v1817 = vpop.permute.xlu0 %1816
      %1820 = vset.pattern.permute.xlu0 0
      %1821 = vperm.xlu0 %1820, %v1251
      %v1822 = vpop.permute.xlu0 %1821
      %1825 = vset.pattern.permute.xlu0 0
      %1826 = vperm.xlu0 %1825, %v1252
      %v1827 = vpop.permute.xlu0 %1826
      %1830 = vset.pattern.permute.xlu0 0
      %1831 = vperm.xlu0 %1830, %v1253
      %v1832 = vpop.permute.xlu0 %1831
      %1835 = vset.pattern.permute.xlu0 0
      %1836 = vperm.xlu0 %1835, %v1254
      %v1837 = vpop.permute.xlu0 %1836
      %1840 = vset.pattern.permute.xlu0 0
      %1841 = vperm.xlu0 %1840, %v1255
      %v1842 = vpop.permute.xlu0 %1841
      %1845 = vset.pattern.permute.xlu0 0
      %1846 = vperm.xlu0 %1845, %v1256
      %v1847 = vpop.permute.xlu0 %1846
      %1850 = vset.pattern.permute.xlu0 0
      %1851 = vperm.xlu0 %1850, %v1257
      %v1852 = vpop.permute.xlu0 %1851
      %1855 = vset.pattern.permute.xlu0 0
      %1856 = vperm.xlu0 %1855, %v1258
      %v1857 = vpop.permute.xlu0 %1856
      %1860 = vset.pattern.permute.xlu0 0
      %1861 = vperm.xlu0 %1860, %v1259
      %v1862 = vpop.permute.xlu0 %1861
      %1865 = vset.pattern.permute.xlu0 0
      %1866 = vperm.xlu0 %1865, %v1260
      %v1867 = vpop.permute.xlu0 %1866
      %1870 = vset.pattern.permute.xlu0 0
      %1871 = vperm.xlu0 %1870, %v1261
      %v1872 = vpop.permute.xlu0 %1871
      %1875 = vset.pattern.permute.xlu0 0
      %1876 = vperm.xlu0 %1875, %v1262
      %v1877 = vpop.permute.xlu0 %1876
      %1880 = vset.pattern.permute.xlu0 0
      %1881 = vperm.xlu0 %1880, %v1263
      %v1882 = vpop.permute.xlu0 %1881
      %1885 = vset.pattern.permute.xlu0 0
      %1886 = vperm.xlu0 %1885, %v1264
      %v1887 = vpop.permute.xlu0 %1886
      %1890 = vset.pattern.permute.xlu0 0
      %1891 = vperm.xlu0 %1890, %v1265
      %v1892 = vpop.permute.xlu0 %1891
      %1895 = vset.pattern.permute.xlu0 0
      %1896 = vperm.xlu0 %1895, %v1266
      %v1897 = vpop.permute.xlu0 %1896
      %1900 = vset.pattern.permute.xlu0 0
      %1901 = vperm.xlu0 %1900, %v1267
      %v1902 = vpop.permute.xlu0 %1901
      %1905 = vset.pattern.permute.xlu0 0
      %1906 = vperm.xlu0 %1905, %v1268
      %v1907 = vpop.permute.xlu0 %1906
      %1910 = vset.pattern.permute.xlu0 0
      %1911 = vperm.xlu0 %1910, %v1269
      %v1912 = vpop.permute.xlu0 %1911
      %1915 = vset.pattern.permute.xlu0 0
      %1916 = vperm.xlu0 %1915, %v1270
      %v1917 = vpop.permute.xlu0 %1916
      %1920 = vset.pattern.permute.xlu0 0
      %1921 = vperm.xlu0 %1920, %v1271
      %v1922 = vpop.permute.xlu0 %1921
      %1925 = vset.pattern.permute.xlu0 0
      %1926 = vperm.xlu0 %1925, %v1272
      %v1927 = vpop.permute.xlu0 %1926
      %1930 = vset.pattern.permute.xlu0 0
      %1931 = vperm.xlu0 %1930, %v1273
      %v1932 = vpop.permute.xlu0 %1931
      %1935 = vset.pattern.permute.xlu0 0
      %1936 = vperm.xlu0 %1935, %v1274
      %v1937 = vpop.permute.xlu0 %1936
      %1940 = vset.pattern.permute.xlu0 0
      %1941 = vperm.xlu0 %1940, %v1275
      %v1942 = vpop.permute.xlu0 %1941
      %1945 = vset.pattern.permute.xlu0 0
      %1946 = vperm.xlu0 %1945, %v1276
      %v1947 = vpop.permute.xlu0 %1946
      %1950 = vset.pattern.permute.xlu0 0
      %1951 = vperm.xlu0 %1950, %v1277
      %v1952 = vpop.permute.xlu0 %1951
      %1955 = vset.pattern.permute.xlu0 0
      %1956 = vperm.xlu0 %1955, %v1278
      %v1957 = vpop.permute.xlu0 %1956
      %1960 = vset.pattern.permute.xlu0 0
      %1961 = vperm.xlu0 %1960, %v1279
      %v1962 = vpop.permute.xlu0 %1961
      %1965 = vset.pattern.permute.xlu0 0
      %1966 = vperm.xlu0 %1965, %v1280
      %v1967 = vpop.permute.xlu0 %1966
      %1970 = vset.pattern.permute.xlu0 0
      %1971 = vperm.xlu0 %1970, %v1281
      %v1972 = vpop.permute.xlu0 %1971
      %1975 = vset.pattern.permute.xlu0 0
      %1976 = vperm.xlu0 %1975, %v1282
      %v1977 = vpop.permute.xlu0 %1976
      %1980 = vset.pattern.permute.xlu0 0
      %1981 = vperm.xlu0 %1980, %v1283
      %v1982 = vpop.permute.xlu0 %1981
      %1985 = vset.pattern.permute.xlu0 0
      %1986 = vperm.xlu0 %1985, %v1284
      %v1987 = vpop.permute.xlu0 %1986
      %1990 = vset.pattern.permute.xlu0 0
      %1991 = vperm.xlu0 %1990, %v1285
      %v1992 = vpop.permute.xlu0 %1991
      %1995 = vset.pattern.permute.xlu0 0
      %1996 = vperm.xlu0 %1995, %v1286
      %v1997 = vpop.permute.xlu0 %1996
      %2000 = vset.pattern.permute.xlu0 0
      %2001 = vperm.xlu0 %2000, %v1287
      %v2002 = vpop.permute.xlu0 %2001
      %2005 = vset.pattern.permute.xlu0 0
      %2006 = vperm.xlu0 %2005, %v1288
      %v2007 = vpop.permute.xlu0 %2006
      %2010 = vset.pattern.permute.xlu0 0
      %2011 = vperm.xlu0 %2010, %v1289
      %v2012 = vpop.permute.xlu0 %2011
      %2015 = vset.pattern.permute.xlu0 0
      %2016 = vperm.xlu0 %2015, %v1290
      %v2017 = vpop.permute.xlu0 %2016
      %2020 = vset.pattern.permute.xlu0 0
      %2021 = vperm.xlu0 %2020, %v1291
      %v2022 = vpop.permute.xlu0 %2021
      %2025 = vset.pattern.permute.xlu0 0
      %2026 = vperm.xlu0 %2025, %v1292
      %v2027 = vpop.permute.xlu0 %2026
      %2030 = vset.pattern.permute.xlu0 0
      %2031 = vperm.xlu0 %2030, %v1293
      %v2032 = vpop.permute.xlu0 %2031
      %2035 = vset.pattern.permute.xlu0 0
      %2036 = vperm.xlu0 %2035, %v1294
      %v2037 = vpop.permute.xlu0 %2036
      %2040 = vset.pattern.permute.xlu0 0
      %2041 = vperm.xlu0 %2040, %v1295
      %v2042 = vpop.permute.xlu0 %2041
      %2045 = vset.pattern.permute.xlu0 0
      %2046 = vperm.xlu0 %2045, %v1296
      %v2047 = vpop.permute.xlu0 %2046
      %2050 = vset.pattern.permute.xlu0 0
      %2051 = vperm.xlu0 %2050, %v1297
      %v2052 = vpop.permute.xlu0 %2051
      %2055 = vset.pattern.permute.xlu0 0
      %2056 = vperm.xlu0 %2055, %v1298
      %v2057 = vpop.permute.xlu0 %2056
      %2060 = vset.pattern.permute.xlu0 0
      %2061 = vperm.xlu0 %2060, %v1299
      %v2062 = vpop.permute.xlu0 %2061
      %2065 = vset.pattern.permute.xlu0 0
      %2066 = vperm.xlu0 %2065, %v1300
      %v2067 = vpop.permute.xlu0 %2066
      %2070 = vset.pattern.permute.xlu0 0
      %2071 = vperm.xlu0 %2070, %v1301
      %v2072 = vpop.permute.xlu0 %2071
      %2075 = vset.pattern.permute.xlu0 0
      %2076 = vperm.xlu0 %2075, %v1302
      %v2077 = vpop.permute.xlu0 %2076
      %2080 = vset.pattern.permute.xlu0 0
      %2081 = vperm.xlu0 %2080, %v1303
      %v2082 = vpop.permute.xlu0 %2081
      %2085 = vset.pattern.permute.xlu0 0
      %2086 = vperm.xlu0 %2085, %v1304
      %v2087 = vpop.permute.xlu0 %2086
      %2090 = vset.pattern.permute.xlu0 0
      %2091 = vperm.xlu0 %2090, %v1305
      %v2092 = vpop.permute.xlu0 %2091
      %2095 = vset.pattern.permute.xlu0 0
      %2096 = vperm.xlu0 %2095, %v1306
      %v2097 = vpop.permute.xlu0 %2096
      %2100 = vset.pattern.permute.xlu0 0
      %2101 = vperm.xlu0 %2100, %v1307
      %v2102 = vpop.permute.xlu0 %2101
      %2105 = vset.pattern.permute.xlu0 0
      %2106 = vperm.xlu0 %2105, %v1308
      %v2107 = vpop.permute.xlu0 %2106
      %2110 = vset.pattern.permute.xlu0 0
      %2111 = vperm.xlu0 %2110, %v1309
      %v2112 = vpop.permute.xlu0 %2111
      %2115 = vset.pattern.permute.xlu0 0
      %2116 = vperm.xlu0 %2115, %v1310
      %v2117 = vpop.permute.xlu0 %2116
      %2120 = vset.pattern.permute.xlu0 0
      %2121 = vperm.xlu0 %2120, %v1311
      %v2122 = vpop.permute.xlu0 %2121
      %2125 = vset.pattern.permute.xlu0 0
      %2126 = vperm.xlu0 %2125, %v1312
      %v2127 = vpop.permute.xlu0 %2126
      %2130 = vset.pattern.permute.xlu0 0
      %2131 = vperm.xlu0 %2130, %v1313
      %v2132 = vpop.permute.xlu0 %2131
      %2135 = vset.pattern.permute.xlu0 0
      %2136 = vperm.xlu0 %2135, %v1314
      %v2137 = vpop.permute.xlu0 %2136
      %2140 = vset.pattern.permute.xlu0 0
      %2141 = vperm.xlu0 %2140, %v1315
      %v2142 = vpop.permute.xlu0 %2141
      %2145 = vset.pattern.permute.xlu0 0
      %2146 = vperm.xlu0 %2145, %v1316
      %v2147 = vpop.permute.xlu0 %2146
      %2150 = vset.pattern.permute.xlu0 0
      %2151 = vperm.xlu0 %2150, %v1317
      %v2152 = vpop.permute.xlu0 %2151
      %2155 = vset.pattern.permute.xlu0 0
      %2156 = vperm.xlu0 %2155, %v1318
      %v2157 = vpop.permute.xlu0 %2156
      %2160 = vset.pattern.permute.xlu0 0
      %2161 = vperm.xlu0 %2160, %v1319
      %v2162 = vpop.permute.xlu0 %2161
      %2165 = vset.pattern.permute.xlu0 0
      %2166 = vperm.xlu0 %2165, %v1320
      %v2167 = vpop.permute.xlu0 %2166
      %2170 = vset.pattern.permute.xlu0 0
      %2171 = vperm.xlu0 %2170, %v1321
      %v2172 = vpop.permute.xlu0 %2171
      %2175 = vset.pattern.permute.xlu0 0
      %2176 = vperm.xlu0 %2175, %v1322
      %v2177 = vpop.permute.xlu0 %2176
      %2180 = vset.pattern.permute.xlu0 0
      %2181 = vperm.xlu0 %2180, %v1323
      %v2182 = vpop.permute.xlu0 %2181
      %2185 = vset.pattern.permute.xlu0 0
      %2186 = vperm.xlu0 %2185, %v1324
      %v2187 = vpop.permute.xlu0 %2186
      %2190 = vset.pattern.permute.xlu0 0
      %2191 = vperm.xlu0 %2190, %v1325
      %v2192 = vpop.permute.xlu0 %2191
      %2195 = vset.pattern.permute.xlu0 0
      %2196 = vperm.xlu0 %2195, %v1326
      %v2197 = vpop.permute.xlu0 %2196
      %2200 = vset.pattern.permute.xlu0 0
      %2201 = vperm.xlu0 %2200, %v1327
      %v2202 = vpop.permute.xlu0 %2201
      %2205 = vset.pattern.permute.xlu0 0
      %2206 = vperm.xlu0 %2205, %v1328
      %v2207 = vpop.permute.xlu0 %2206
      %2210 = vset.pattern.permute.xlu0 0
      %2211 = vperm.xlu0 %2210, %v1329
      %v2212 = vpop.permute.xlu0 %2211
      %2215 = vset.pattern.permute.xlu0 0
      %2216 = vperm.xlu0 %2215, %v1330
      %v2217 = vpop.permute.xlu0 %2216
      %2220 = vset.pattern.permute.xlu0 0
      %2221 = vperm.xlu0 %2220, %v1331
      %v2222 = vpop.permute.xlu0 %2221
      %2225 = vset.pattern.permute.xlu0 0
      %2226 = vperm.xlu0 %2225, %v1332
      %v2227 = vpop.permute.xlu0 %2226
      %2230 = vset.pattern.permute.xlu0 0
      %2231 = vperm.xlu0 %2230, %v1333
      %v2232 = vpop.permute.xlu0 %2231
      %2235 = vset.pattern.permute.xlu0 0
      %2236 = vperm.xlu0 %2235, %v1334
      %v2237 = vpop.permute.xlu0 %2236
      %2240 = vset.pattern.permute.xlu0 0
      %2241 = vperm.xlu0 %2240, %v1335
      %v2242 = vpop.permute.xlu0 %2241
      %2245 = vset.pattern.permute.xlu0 0
      %2246 = vperm.xlu0 %2245, %v1336
      %v2247 = vpop.permute.xlu0 %2246
      %2250 = vset.pattern.permute.xlu0 0
      %2251 = vperm.xlu0 %2250, %v1337
      %v2252 = vpop.permute.xlu0 %2251
      %2255 = vset.pattern.permute.xlu0 0
      %2256 = vperm.xlu0 %2255, %v1338
      %v2257 = vpop.permute.xlu0 %2256
      %2260 = vset.pattern.permute.xlu0 0
      %2261 = vperm.xlu0 %2260, %v1339
      %v2262 = vpop.permute.xlu0 %2261
      %v2264 = vmul.f32 %v1472, %v1607
      %v2265 = vmul.f32 %v1473, %v1612
      %v2266 = vmul.f32 %v1474, %v1617
      %v2267 = vmul.f32 %v1475, %v1622
      %v2268 = vmul.f32 %v1476, %v1627
      %v2269 = vmul.f32 %v1477, %v1632
      %v2270 = vmul.f32 %v1478, %v1637
      %v2271 = vmul.f32 %v1479, %v1642
      %v2272 = vmul.f32 %v1480, %v1647
      %v2273 = vmul.f32 %v1481, %v1652
      %v2274 = vmul.f32 %v1482, %v1657
      %v2275 = vmul.f32 %v1483, %v1662
      %v2276 = vmul.f32 %v1484, %v1667
      %v2277 = vmul.f32 %v1485, %v1672
      %v2278 = vmul.f32 %v1486, %v1677
      %v2279 = vmul.f32 %v1487, %v1682
      %v2280 = vmul.f32 %v1488, %v1687
      %v2281 = vmul.f32 %v1489, %v1692
      %v2282 = vmul.f32 %v1490, %v1697
      %v2283 = vmul.f32 %v1491, %v1702
      %v2284 = vmul.f32 %v1492, %v1707
      %v2285 = vmul.f32 %v1493, %v1712
      %v2286 = vmul.f32 %v1494, %v1717
      %v2287 = vmul.f32 %v1495, %v1722
      %v2288 = vmul.f32 %v1496, %v1727
      %v2289 = vmul.f32 %v1497, %v1732
      %v2290 = vmul.f32 %v1498, %v1737
      %v2291 = vmul.f32 %v1499, %v1742
      %v2292 = vmul.f32 %v1500, %v1747
      %v2293 = vmul.f32 %v1501, %v1752
      %v2294 = vmul.f32 %v1502, %v1757
      %v2295 = vmul.f32 %v1503, %v1762
      %v2296 = vmul.f32 %v1504, %v1767
      %v2297 = vmul.f32 %v1505, %v1772
      %v2298 = vmul.f32 %v1506, %v1777
      %v2299 = vmul.f32 %v1507, %v1782
      %v2300 = vmul.f32 %v1508, %v1787
      %v2301 = vmul.f32 %v1509, %v1792
      %v2302 = vmul.f32 %v1510, %v1797
      %v2303 = vmul.f32 %v1511, %v1802
      %v2304 = vmul.f32 %v1512, %v1807
      %v2305 = vmul.f32 %v1513, %v1812
      %v2306 = vmul.f32 %v1514, %v1817
      %v2307 = vmul.f32 %v1515, %v1822
      %v2308 = vmul.f32 %v1516, %v1827
      %v2309 = vmul.f32 %v1517, %v1832
      %v2310 = vmul.f32 %v1518, %v1837
      %v2311 = vmul.f32 %v1519, %v1842
      %v2312 = vmul.f32 %v1520, %v1847
      %v2313 = vmul.f32 %v1521, %v1852
      %v2314 = vmul.f32 %v1522, %v1857
      %v2315 = vmul.f32 %v1523, %v1862
      %v2316 = vmul.f32 %v1524, %v1867
      %v2317 = vmul.f32 %v1525, %v1872
      %v2318 = vmul.f32 %v1526, %v1877
      %v2319 = vmul.f32 %v1527, %v1882
      %v2320 = vmul.f32 %v1528, %v1887
      %v2321 = vmul.f32 %v1529, %v1892
      %v2322 = vmul.f32 %v1530, %v1897
      %v2323 = vmul.f32 %v1531, %v1902
      %v2324 = vmul.f32 %v1532, %v1907
      %v2325 = vmul.f32 %v1533, %v1912
      %v2326 = vmul.f32 %v1534, %v1917
      %v2327 = vmul.f32 %v1535, %v1922
      %v2328 = vmul.f32 %v1536, %v1927
      %v2329 = vmul.f32 %v1537, %v1932
      %v2330 = vmul.f32 %v1538, %v1937
      %v2331 = vmul.f32 %v1539, %v1942
      %v2332 = vmul.f32 %v1540, %v1947
      %v2333 = vmul.f32 %v1541, %v1952
      %v2334 = vmul.f32 %v1542, %v1957
      %v2335 = vmul.f32 %v1543, %v1962
      %v2336 = vmul.f32 %v1544, %v1967
      %v2337 = vmul.f32 %v1545, %v1972
      %v2338 = vmul.f32 %v1546, %v1977
      %v2339 = vmul.f32 %v1547, %v1982
      %v2340 = vmul.f32 %v1548, %v1987
      %v2341 = vmul.f32 %v1549, %v1992
      %v2342 = vmul.f32 %v1550, %v1997
      %v2343 = vmul.f32 %v1551, %v2002
      %v2344 = vmul.f32 %v1552, %v2007
      %v2345 = vmul.f32 %v1553, %v2012
      %v2346 = vmul.f32 %v1554, %v2017
      %v2347 = vmul.f32 %v1555, %v2022
      %v2348 = vmul.f32 %v1556, %v2027
      %v2349 = vmul.f32 %v1557, %v2032
      %v2350 = vmul.f32 %v1558, %v2037
      %v2351 = vmul.f32 %v1559, %v2042
      %v2352 = vmul.f32 %v1560, %v2047
      %v2353 = vmul.f32 %v1561, %v2052
      %v2354 = vmul.f32 %v1562, %v2057
      %v2355 = vmul.f32 %v1563, %v2062
      %v2356 = vmul.f32 %v1564, %v2067
      %v2357 = vmul.f32 %v1565, %v2072
      %v2358 = vmul.f32 %v1566, %v2077
      %v2359 = vmul.f32 %v1567, %v2082
      %v2360 = vmul.f32 %v1568, %v2087
      %v2361 = vmul.f32 %v1569, %v2092
      %v2362 = vmul.f32 %v1570, %v2097
      %v2363 = vmul.f32 %v1571, %v2102
      %v2364 = vmul.f32 %v1572, %v2107
      %v2365 = vmul.f32 %v1573, %v2112
      %v2366 = vmul.f32 %v1574, %v2117
      %v2367 = vmul.f32 %v1575, %v2122
      %v2368 = vmul.f32 %v1576, %v2127
      %v2369 = vmul.f32 %v1577, %v2132
      %v2370 = vmul.f32 %v1578, %v2137
      %v2371 = vmul.f32 %v1579, %v2142
      %v2372 = vmul.f32 %v1580, %v2147
      %v2373 = vmul.f32 %v1581, %v2152
      %v2374 = vmul.f32 %v1582, %v2157
      %v2375 = vmul.f32 %v1583, %v2162
      %v2376 = vmul.f32 %v1584, %v2167
      %v2377 = vmul.f32 %v1585, %v2172
      %v2378 = vmul.f32 %v1586, %v2177
      %v2379 = vmul.f32 %v1587, %v2182
      %v2380 = vmul.f32 %v1588, %v2187
      %v2381 = vmul.f32 %v1589, %v2192
      %v2382 = vmul.f32 %v1590, %v2197
      %v2383 = vmul.f32 %v1591, %v2202
      %v2384 = vmul.f32 %v1592, %v2207
      %v2385 = vmul.f32 %v1593, %v2212
      %v2386 = vmul.f32 %v1594, %v2217
      %v2387 = vmul.f32 %v1595, %v2222
      %v2388 = vmul.f32 %v1596, %v2227
      %v2389 = vmul.f32 %v1597, %v2232
      %v2390 = vmul.f32 %v1598, %v2237
      %v2391 = vmul.f32 %v1599, %v2242
      %v2392 = vmul.f32 %v1600, %v2247
      %v2393 = vmul.f32 %v1601, %v2252
      %v2394 = vmul.f32 %v1602, %v2257
      %v2395 = vmul.f32 %v1603, %v2262
      %2397 = vset.pattern.permute.xlu0 0
      %2398 = vperm.xlu0 %2397, %v1340
      %v2399 = vpop.permute.xlu0 %2398
      %2402 = vset.pattern.permute.xlu0 0
      %2403 = vperm.xlu0 %2402, %v1341
      %v2404 = vpop.permute.xlu0 %2403
      %2407 = vset.pattern.permute.xlu0 0
      %2408 = vperm.xlu0 %2407, %v1342
      %v2409 = vpop.permute.xlu0 %2408
      %2412 = vset.pattern.permute.xlu0 0
      %2413 = vperm.xlu0 %2412, %v1343
      %v2414 = vpop.permute.xlu0 %2413
      %2417 = vset.pattern.permute.xlu0 0
      %2418 = vperm.xlu0 %2417, %v1344
      %v2419 = vpop.permute.xlu0 %2418
      %2422 = vset.pattern.permute.xlu0 0
      %2423 = vperm.xlu0 %2422, %v1345
      %v2424 = vpop.permute.xlu0 %2423
      %2427 = vset.pattern.permute.xlu0 0
      %2428 = vperm.xlu0 %2427, %v1346
      %v2429 = vpop.permute.xlu0 %2428
      %2432 = vset.pattern.permute.xlu0 0
      %2433 = vperm.xlu0 %2432, %v1347
      %v2434 = vpop.permute.xlu0 %2433
      %2437 = vset.pattern.permute.xlu0 0
      %2438 = vperm.xlu0 %2437, %v1348
      %v2439 = vpop.permute.xlu0 %2438
      %2442 = vset.pattern.permute.xlu0 0
      %2443 = vperm.xlu0 %2442, %v1349
      %v2444 = vpop.permute.xlu0 %2443
      %2447 = vset.pattern.permute.xlu0 0
      %2448 = vperm.xlu0 %2447, %v1350
      %v2449 = vpop.permute.xlu0 %2448
      %2452 = vset.pattern.permute.xlu0 0
      %2453 = vperm.xlu0 %2452, %v1351
      %v2454 = vpop.permute.xlu0 %2453
      %2457 = vset.pattern.permute.xlu0 0
      %2458 = vperm.xlu0 %2457, %v1352
      %v2459 = vpop.permute.xlu0 %2458
      %2462 = vset.pattern.permute.xlu0 0
      %2463 = vperm.xlu0 %2462, %v1353
      %v2464 = vpop.permute.xlu0 %2463
      %2467 = vset.pattern.permute.xlu0 0
      %2468 = vperm.xlu0 %2467, %v1354
      %v2469 = vpop.permute.xlu0 %2468
      %2472 = vset.pattern.permute.xlu0 0
      %2473 = vperm.xlu0 %2472, %v1355
      %v2474 = vpop.permute.xlu0 %2473
      %2477 = vset.pattern.permute.xlu0 0
      %2478 = vperm.xlu0 %2477, %v1356
      %v2479 = vpop.permute.xlu0 %2478
      %2482 = vset.pattern.permute.xlu0 0
      %2483 = vperm.xlu0 %2482, %v1357
      %v2484 = vpop.permute.xlu0 %2483
      %2487 = vset.pattern.permute.xlu0 0
      %2488 = vperm.xlu0 %2487, %v1358
      %v2489 = vpop.permute.xlu0 %2488
      %2492 = vset.pattern.permute.xlu0 0
      %2493 = vperm.xlu0 %2492, %v1359
      %v2494 = vpop.permute.xlu0 %2493
      %2497 = vset.pattern.permute.xlu0 0
      %2498 = vperm.xlu0 %2497, %v1360
      %v2499 = vpop.permute.xlu0 %2498
      %2502 = vset.pattern.permute.xlu0 0
      %2503 = vperm.xlu0 %2502, %v1361
      %v2504 = vpop.permute.xlu0 %2503
      %2507 = vset.pattern.permute.xlu0 0
      %2508 = vperm.xlu0 %2507, %v1362
      %v2509 = vpop.permute.xlu0 %2508
      %2512 = vset.pattern.permute.xlu0 0
      %2513 = vperm.xlu0 %2512, %v1363
      %v2514 = vpop.permute.xlu0 %2513
      %2517 = vset.pattern.permute.xlu0 0
      %2518 = vperm.xlu0 %2517, %v1364
      %v2519 = vpop.permute.xlu0 %2518
      %2522 = vset.pattern.permute.xlu0 0
      %2523 = vperm.xlu0 %2522, %v1365
      %v2524 = vpop.permute.xlu0 %2523
      %2527 = vset.pattern.permute.xlu0 0
      %2528 = vperm.xlu0 %2527, %v1366
      %v2529 = vpop.permute.xlu0 %2528
      %2532 = vset.pattern.permute.xlu0 0
      %2533 = vperm.xlu0 %2532, %v1367
      %v2534 = vpop.permute.xlu0 %2533
      %2537 = vset.pattern.permute.xlu0 0
      %2538 = vperm.xlu0 %2537, %v1368
      %v2539 = vpop.permute.xlu0 %2538
      %2542 = vset.pattern.permute.xlu0 0
      %2543 = vperm.xlu0 %2542, %v1369
      %v2544 = vpop.permute.xlu0 %2543
      %2547 = vset.pattern.permute.xlu0 0
      %2548 = vperm.xlu0 %2547, %v1370
      %v2549 = vpop.permute.xlu0 %2548
      %2552 = vset.pattern.permute.xlu0 0
      %2553 = vperm.xlu0 %2552, %v1371
      %v2554 = vpop.permute.xlu0 %2553
      %2557 = vset.pattern.permute.xlu0 0
      %2558 = vperm.xlu0 %2557, %v1372
      %v2559 = vpop.permute.xlu0 %2558
      %2562 = vset.pattern.permute.xlu0 0
      %2563 = vperm.xlu0 %2562, %v1373
      %v2564 = vpop.permute.xlu0 %2563
      %2567 = vset.pattern.permute.xlu0 0
      %2568 = vperm.xlu0 %2567, %v1374
      %v2569 = vpop.permute.xlu0 %2568
      %2572 = vset.pattern.permute.xlu0 0
      %2573 = vperm.xlu0 %2572, %v1375
      %v2574 = vpop.permute.xlu0 %2573
      %2577 = vset.pattern.permute.xlu0 0
      %2578 = vperm.xlu0 %2577, %v1376
      %v2579 = vpop.permute.xlu0 %2578
      %2582 = vset.pattern.permute.xlu0 0
      %2583 = vperm.xlu0 %2582, %v1377
      %v2584 = vpop.permute.xlu0 %2583
      %2587 = vset.pattern.permute.xlu0 0
      %2588 = vperm.xlu0 %2587, %v1378
      %v2589 = vpop.permute.xlu0 %2588
      %2592 = vset.pattern.permute.xlu0 0
      %2593 = vperm.xlu0 %2592, %v1379
      %v2594 = vpop.permute.xlu0 %2593
      %2597 = vset.pattern.permute.xlu0 0
      %2598 = vperm.xlu0 %2597, %v1380
      %v2599 = vpop.permute.xlu0 %2598
      %2602 = vset.pattern.permute.xlu0 0
      %2603 = vperm.xlu0 %2602, %v1381
      %v2604 = vpop.permute.xlu0 %2603
      %2607 = vset.pattern.permute.xlu0 0
      %2608 = vperm.xlu0 %2607, %v1382
      %v2609 = vpop.permute.xlu0 %2608
      %2612 = vset.pattern.permute.xlu0 0
      %2613 = vperm.xlu0 %2612, %v1383
      %v2614 = vpop.permute.xlu0 %2613
      %2617 = vset.pattern.permute.xlu0 0
      %2618 = vperm.xlu0 %2617, %v1384
      %v2619 = vpop.permute.xlu0 %2618
      %2622 = vset.pattern.permute.xlu0 0
      %2623 = vperm.xlu0 %2622, %v1385
      %v2624 = vpop.permute.xlu0 %2623
      %2627 = vset.pattern.permute.xlu0 0
      %2628 = vperm.xlu0 %2627, %v1386
      %v2629 = vpop.permute.xlu0 %2628
      %2632 = vset.pattern.permute.xlu0 0
      %2633 = vperm.xlu0 %2632, %v1387
      %v2634 = vpop.permute.xlu0 %2633
      %2637 = vset.pattern.permute.xlu0 0
      %2638 = vperm.xlu0 %2637, %v1388
      %v2639 = vpop.permute.xlu0 %2638
      %2642 = vset.pattern.permute.xlu0 0
      %2643 = vperm.xlu0 %2642, %v1389
      %v2644 = vpop.permute.xlu0 %2643
      %2647 = vset.pattern.permute.xlu0 0
      %2648 = vperm.xlu0 %2647, %v1390
      %v2649 = vpop.permute.xlu0 %2648
      %2652 = vset.pattern.permute.xlu0 0
      %2653 = vperm.xlu0 %2652, %v1391
      %v2654 = vpop.permute.xlu0 %2653
      %2657 = vset.pattern.permute.xlu0 0
      %2658 = vperm.xlu0 %2657, %v1392
      %v2659 = vpop.permute.xlu0 %2658
      %2662 = vset.pattern.permute.xlu0 0
      %2663 = vperm.xlu0 %2662, %v1393
      %v2664 = vpop.permute.xlu0 %2663
      %2667 = vset.pattern.permute.xlu0 0
      %2668 = vperm.xlu0 %2667, %v1394
      %v2669 = vpop.permute.xlu0 %2668
      %2672 = vset.pattern.permute.xlu0 0
      %2673 = vperm.xlu0 %2672, %v1395
      %v2674 = vpop.permute.xlu0 %2673
      %2677 = vset.pattern.permute.xlu0 0
      %2678 = vperm.xlu0 %2677, %v1396
      %v2679 = vpop.permute.xlu0 %2678
      %2682 = vset.pattern.permute.xlu0 0
      %2683 = vperm.xlu0 %2682, %v1397
      %v2684 = vpop.permute.xlu0 %2683
      %2687 = vset.pattern.permute.xlu0 0
      %2688 = vperm.xlu0 %2687, %v1398
      %v2689 = vpop.permute.xlu0 %2688
      %2692 = vset.pattern.permute.xlu0 0
      %2693 = vperm.xlu0 %2692, %v1399
      %v2694 = vpop.permute.xlu0 %2693
      %2697 = vset.pattern.permute.xlu0 0
      %2698 = vperm.xlu0 %2697, %v1400
      %v2699 = vpop.permute.xlu0 %2698
      %2702 = vset.pattern.permute.xlu0 0
      %2703 = vperm.xlu0 %2702, %v1401
      %v2704 = vpop.permute.xlu0 %2703
      %2707 = vset.pattern.permute.xlu0 0
      %2708 = vperm.xlu0 %2707, %v1402
      %v2709 = vpop.permute.xlu0 %2708
      %2712 = vset.pattern.permute.xlu0 0
      %2713 = vperm.xlu0 %2712, %v1403
      %v2714 = vpop.permute.xlu0 %2713
      %2717 = vset.pattern.permute.xlu0 0
      %2718 = vperm.xlu0 %2717, %v1404
      %v2719 = vpop.permute.xlu0 %2718
      %2722 = vset.pattern.permute.xlu0 0
      %2723 = vperm.xlu0 %2722, %v1405
      %v2724 = vpop.permute.xlu0 %2723
      %2727 = vset.pattern.permute.xlu0 0
      %2728 = vperm.xlu0 %2727, %v1406
      %v2729 = vpop.permute.xlu0 %2728
      %2732 = vset.pattern.permute.xlu0 0
      %2733 = vperm.xlu0 %2732, %v1407
      %v2734 = vpop.permute.xlu0 %2733
      %2737 = vset.pattern.permute.xlu0 0
      %2738 = vperm.xlu0 %2737, %v1408
      %v2739 = vpop.permute.xlu0 %2738
      %2742 = vset.pattern.permute.xlu0 0
      %2743 = vperm.xlu0 %2742, %v1409
      %v2744 = vpop.permute.xlu0 %2743
      %2747 = vset.pattern.permute.xlu0 0
      %2748 = vperm.xlu0 %2747, %v1410
      %v2749 = vpop.permute.xlu0 %2748
      %2752 = vset.pattern.permute.xlu0 0
      %2753 = vperm.xlu0 %2752, %v1411
      %v2754 = vpop.permute.xlu0 %2753
      %2757 = vset.pattern.permute.xlu0 0
      %2758 = vperm.xlu0 %2757, %v1412
      %v2759 = vpop.permute.xlu0 %2758
      %2762 = vset.pattern.permute.xlu0 0
      %2763 = vperm.xlu0 %2762, %v1413
      %v2764 = vpop.permute.xlu0 %2763
      %2767 = vset.pattern.permute.xlu0 0
      %2768 = vperm.xlu0 %2767, %v1414
      %v2769 = vpop.permute.xlu0 %2768
      %2772 = vset.pattern.permute.xlu0 0
      %2773 = vperm.xlu0 %2772, %v1415
      %v2774 = vpop.permute.xlu0 %2773
      %2777 = vset.pattern.permute.xlu0 0
      %2778 = vperm.xlu0 %2777, %v1416
      %v2779 = vpop.permute.xlu0 %2778
      %2782 = vset.pattern.permute.xlu0 0
      %2783 = vperm.xlu0 %2782, %v1417
      %v2784 = vpop.permute.xlu0 %2783
      %2787 = vset.pattern.permute.xlu0 0
      %2788 = vperm.xlu0 %2787, %v1418
      %v2789 = vpop.permute.xlu0 %2788
      %2792 = vset.pattern.permute.xlu0 0
      %2793 = vperm.xlu0 %2792, %v1419
      %v2794 = vpop.permute.xlu0 %2793
      %2797 = vset.pattern.permute.xlu0 0
      %2798 = vperm.xlu0 %2797, %v1420
      %v2799 = vpop.permute.xlu0 %2798
      %2802 = vset.pattern.permute.xlu0 0
      %2803 = vperm.xlu0 %2802, %v1421
      %v2804 = vpop.permute.xlu0 %2803
      %2807 = vset.pattern.permute.xlu0 0
      %2808 = vperm.xlu0 %2807, %v1422
      %v2809 = vpop.permute.xlu0 %2808
      %2812 = vset.pattern.permute.xlu0 0
      %2813 = vperm.xlu0 %2812, %v1423
      %v2814 = vpop.permute.xlu0 %2813
      %2817 = vset.pattern.permute.xlu0 0
      %2818 = vperm.xlu0 %2817, %v1424
      %v2819 = vpop.permute.xlu0 %2818
      %2822 = vset.pattern.permute.xlu0 0
      %2823 = vperm.xlu0 %2822, %v1425
      %v2824 = vpop.permute.xlu0 %2823
      %2827 = vset.pattern.permute.xlu0 0
      %2828 = vperm.xlu0 %2827, %v1426
      %v2829 = vpop.permute.xlu0 %2828
      %2832 = vset.pattern.permute.xlu0 0
      %2833 = vperm.xlu0 %2832, %v1427
      %v2834 = vpop.permute.xlu0 %2833
      %2837 = vset.pattern.permute.xlu0 0
      %2838 = vperm.xlu0 %2837, %v1428
      %v2839 = vpop.permute.xlu0 %2838
      %2842 = vset.pattern.permute.xlu0 0
      %2843 = vperm.xlu0 %2842, %v1429
      %v2844 = vpop.permute.xlu0 %2843
      %2847 = vset.pattern.permute.xlu0 0
      %2848 = vperm.xlu0 %2847, %v1430
      %v2849 = vpop.permute.xlu0 %2848
      %2852 = vset.pattern.permute.xlu0 0
      %2853 = vperm.xlu0 %2852, %v1431
      %v2854 = vpop.permute.xlu0 %2853
      %2857 = vset.pattern.permute.xlu0 0
      %2858 = vperm.xlu0 %2857, %v1432
      %v2859 = vpop.permute.xlu0 %2858
      %2862 = vset.pattern.permute.xlu0 0
      %2863 = vperm.xlu0 %2862, %v1433
      %v2864 = vpop.permute.xlu0 %2863
      %2867 = vset.pattern.permute.xlu0 0
      %2868 = vperm.xlu0 %2867, %v1434
      %v2869 = vpop.permute.xlu0 %2868
      %2872 = vset.pattern.permute.xlu0 0
      %2873 = vperm.xlu0 %2872, %v1435
      %v2874 = vpop.permute.xlu0 %2873
      %2877 = vset.pattern.permute.xlu0 0
      %2878 = vperm.xlu0 %2877, %v1436
      %v2879 = vpop.permute.xlu0 %2878
      %2882 = vset.pattern.permute.xlu0 0
      %2883 = vperm.xlu0 %2882, %v1437
      %v2884 = vpop.permute.xlu0 %2883
      %2887 = vset.pattern.permute.xlu0 0
      %2888 = vperm.xlu0 %2887, %v1438
      %v2889 = vpop.permute.xlu0 %2888
      %2892 = vset.pattern.permute.xlu0 0
      %2893 = vperm.xlu0 %2892, %v1439
      %v2894 = vpop.permute.xlu0 %2893
      %2897 = vset.pattern.permute.xlu0 0
      %2898 = vperm.xlu0 %2897, %v1440
      %v2899 = vpop.permute.xlu0 %2898
      %2902 = vset.pattern.permute.xlu0 0
      %2903 = vperm.xlu0 %2902, %v1441
      %v2904 = vpop.permute.xlu0 %2903
      %2907 = vset.pattern.permute.xlu0 0
      %2908 = vperm.xlu0 %2907, %v1442
      %v2909 = vpop.permute.xlu0 %2908
      %2912 = vset.pattern.permute.xlu0 0
      %2913 = vperm.xlu0 %2912, %v1443
      %v2914 = vpop.permute.xlu0 %2913
      %2917 = vset.pattern.permute.xlu0 0
      %2918 = vperm.xlu0 %2917, %v1444
      %v2919 = vpop.permute.xlu0 %2918
      %2922 = vset.pattern.permute.xlu0 0
      %2923 = vperm.xlu0 %2922, %v1445
      %v2924 = vpop.permute.xlu0 %2923
      %2927 = vset.pattern.permute.xlu0 0
      %2928 = vperm.xlu0 %2927, %v1446
      %v2929 = vpop.permute.xlu0 %2928
      %2932 = vset.pattern.permute.xlu0 0
      %2933 = vperm.xlu0 %2932, %v1447
      %v2934 = vpop.permute.xlu0 %2933
      %2937 = vset.pattern.permute.xlu0 0
      %2938 = vperm.xlu0 %2937, %v1448
      %v2939 = vpop.permute.xlu0 %2938
      %2942 = vset.pattern.permute.xlu0 0
      %2943 = vperm.xlu0 %2942, %v1449
      %v2944 = vpop.permute.xlu0 %2943
      %2947 = vset.pattern.permute.xlu0 0
      %2948 = vperm.xlu0 %2947, %v1450
      %v2949 = vpop.permute.xlu0 %2948
      %2952 = vset.pattern.permute.xlu0 0
      %2953 = vperm.xlu0 %2952, %v1451
      %v2954 = vpop.permute.xlu0 %2953
      %2957 = vset.pattern.permute.xlu0 0
      %2958 = vperm.xlu0 %2957, %v1452
      %v2959 = vpop.permute.xlu0 %2958
      %2962 = vset.pattern.permute.xlu0 0
      %2963 = vperm.xlu0 %2962, %v1453
      %v2964 = vpop.permute.xlu0 %2963
      %2967 = vset.pattern.permute.xlu0 0
      %2968 = vperm.xlu0 %2967, %v1454
      %v2969 = vpop.permute.xlu0 %2968
      %2972 = vset.pattern.permute.xlu0 0
      %2973 = vperm.xlu0 %2972, %v1455
      %v2974 = vpop.permute.xlu0 %2973
      %2977 = vset.pattern.permute.xlu0 0
      %2978 = vperm.xlu0 %2977, %v1456
      %v2979 = vpop.permute.xlu0 %2978
      %2982 = vset.pattern.permute.xlu0 0
      %2983 = vperm.xlu0 %2982, %v1457
      %v2984 = vpop.permute.xlu0 %2983
      %2987 = vset.pattern.permute.xlu0 0
      %2988 = vperm.xlu0 %2987, %v1458
      %v2989 = vpop.permute.xlu0 %2988
      %2992 = vset.pattern.permute.xlu0 0
      %2993 = vperm.xlu0 %2992, %v1459
      %v2994 = vpop.permute.xlu0 %2993
      %2997 = vset.pattern.permute.xlu0 0
      %2998 = vperm.xlu0 %2997, %v1460
      %v2999 = vpop.permute.xlu0 %2998
      %3002 = vset.pattern.permute.xlu0 0
      %3003 = vperm.xlu0 %3002, %v1461
      %v3004 = vpop.permute.xlu0 %3003
      %3007 = vset.pattern.permute.xlu0 0
      %3008 = vperm.xlu0 %3007, %v1462
      %v3009 = vpop.permute.xlu0 %3008
      %3012 = vset.pattern.permute.xlu0 0
      %3013 = vperm.xlu0 %3012, %v1463
      %v3014 = vpop.permute.xlu0 %3013
      %3017 = vset.pattern.permute.xlu0 0
      %3018 = vperm.xlu0 %3017, %v1464
      %v3019 = vpop.permute.xlu0 %3018
      %3022 = vset.pattern.permute.xlu0 0
      %3023 = vperm.xlu0 %3022, %v1465
      %v3024 = vpop.permute.xlu0 %3023
      %3027 = vset.pattern.permute.xlu0 0
      %3028 = vperm.xlu0 %3027, %v1466
      %v3029 = vpop.permute.xlu0 %3028
      %3032 = vset.pattern.permute.xlu0 0
      %3033 = vperm.xlu0 %3032, %v1467
      %v3034 = vpop.permute.xlu0 %3033
      %3037 = vset.pattern.permute.xlu0 0
      %3038 = vperm.xlu0 %3037, %v1468
      %v3039 = vpop.permute.xlu0 %3038
      %3042 = vset.pattern.permute.xlu0 0
      %3043 = vperm.xlu0 %3042, %v1469
      %v3044 = vpop.permute.xlu0 %3043
      %3047 = vset.pattern.permute.xlu0 0
      %3048 = vperm.xlu0 %3047, %v1470
      %v3049 = vpop.permute.xlu0 %3048
      %3052 = vset.pattern.permute.xlu0 0
      %3053 = vperm.xlu0 %3052, %v1471
      %v3054 = vpop.permute.xlu0 %3053
      %v3056 = vadd.f32 %v2264, %v2399
      %v3057 = vadd.f32 %v2265, %v2404
      %v3058 = vadd.f32 %v2266, %v2409
      %v3059 = vadd.f32 %v2267, %v2414
      %v3060 = vadd.f32 %v2268, %v2419
      %v3061 = vadd.f32 %v2269, %v2424
      %v3062 = vadd.f32 %v2270, %v2429
      %v3063 = vadd.f32 %v2271, %v2434
      %v3064 = vadd.f32 %v2272, %v2439
      %v3065 = vadd.f32 %v2273, %v2444
      %v3066 = vadd.f32 %v2274, %v2449
      %v3067 = vadd.f32 %v2275, %v2454
      %v3068 = vadd.f32 %v2276, %v2459
      %v3069 = vadd.f32 %v2277, %v2464
      %v3070 = vadd.f32 %v2278, %v2469
      %v3071 = vadd.f32 %v2279, %v2474
      %v3072 = vadd.f32 %v2280, %v2479
      %v3073 = vadd.f32 %v2281, %v2484
      %v3074 = vadd.f32 %v2282, %v2489
      %v3075 = vadd.f32 %v2283, %v2494
      %v3076 = vadd.f32 %v2284, %v2499
      %v3077 = vadd.f32 %v2285, %v2504
      %v3078 = vadd.f32 %v2286, %v2509
      %v3079 = vadd.f32 %v2287, %v2514
      %v3080 = vadd.f32 %v2288, %v2519
      %v3081 = vadd.f32 %v2289, %v2524
      %v3082 = vadd.f32 %v2290, %v2529
      %v3083 = vadd.f32 %v2291, %v2534
      %v3084 = vadd.f32 %v2292, %v2539
      %v3085 = vadd.f32 %v2293, %v2544
      %v3086 = vadd.f32 %v2294, %v2549
      %v3087 = vadd.f32 %v2295, %v2554
      %v3088 = vadd.f32 %v2296, %v2559
      %v3089 = vadd.f32 %v2297, %v2564
      %v3090 = vadd.f32 %v2298, %v2569
      %v3091 = vadd.f32 %v2299, %v2574
      %v3092 = vadd.f32 %v2300, %v2579
      %v3093 = vadd.f32 %v2301, %v2584
      %v3094 = vadd.f32 %v2302, %v2589
      %v3095 = vadd.f32 %v2303, %v2594
      %v3096 = vadd.f32 %v2304, %v2599
      %v3097 = vadd.f32 %v2305, %v2604
      %v3098 = vadd.f32 %v2306, %v2609
      %v3099 = vadd.f32 %v2307, %v2614
      %v3100 = vadd.f32 %v2308, %v2619
      %v3101 = vadd.f32 %v2309, %v2624
      %v3102 = vadd.f32 %v2310, %v2629
      %v3103 = vadd.f32 %v2311, %v2634
      %v3104 = vadd.f32 %v2312, %v2639
      %v3105 = vadd.f32 %v2313, %v2644
      %v3106 = vadd.f32 %v2314, %v2649
      %v3107 = vadd.f32 %v2315, %v2654
      %v3108 = vadd.f32 %v2316, %v2659
      %v3109 = vadd.f32 %v2317, %v2664
      %v3110 = vadd.f32 %v2318, %v2669
      %v3111 = vadd.f32 %v2319, %v2674
      %v3112 = vadd.f32 %v2320, %v2679
      %v3113 = vadd.f32 %v2321, %v2684
      %v3114 = vadd.f32 %v2322, %v2689
      %v3115 = vadd.f32 %v2323, %v2694
      %v3116 = vadd.f32 %v2324, %v2699
      %v3117 = vadd.f32 %v2325, %v2704
      %v3118 = vadd.f32 %v2326, %v2709
      %v3119 = vadd.f32 %v2327, %v2714
      %v3120 = vadd.f32 %v2328, %v2719
      %v3121 = vadd.f32 %v2329, %v2724
      %v3122 = vadd.f32 %v2330, %v2729
      %v3123 = vadd.f32 %v2331, %v2734
      %v3124 = vadd.f32 %v2332, %v2739
      %v3125 = vadd.f32 %v2333, %v2744
      %v3126 = vadd.f32 %v2334, %v2749
      %v3127 = vadd.f32 %v2335, %v2754
      %v3128 = vadd.f32 %v2336, %v2759
      %v3129 = vadd.f32 %v2337, %v2764
      %v3130 = vadd.f32 %v2338, %v2769
      %v3131 = vadd.f32 %v2339, %v2774
      %v3132 = vadd.f32 %v2340, %v2779
      %v3133 = vadd.f32 %v2341, %v2784
      %v3134 = vadd.f32 %v2342, %v2789
      %v3135 = vadd.f32 %v2343, %v2794
      %v3136 = vadd.f32 %v2344, %v2799
      %v3137 = vadd.f32 %v2345, %v2804
      %v3138 = vadd.f32 %v2346, %v2809
      %v3139 = vadd.f32 %v2347, %v2814
      %v3140 = vadd.f32 %v2348, %v2819
      %v3141 = vadd.f32 %v2349, %v2824
      %v3142 = vadd.f32 %v2350, %v2829
      %v3143 = vadd.f32 %v2351, %v2834
      %v3144 = vadd.f32 %v2352, %v2839
      %v3145 = vadd.f32 %v2353, %v2844
      %v3146 = vadd.f32 %v2354, %v2849
      %v3147 = vadd.f32 %v2355, %v2854
      %v3148 = vadd.f32 %v2356, %v2859
      %v3149 = vadd.f32 %v2357, %v2864
      %v3150 = vadd.f32 %v2358, %v2869
      %v3151 = vadd.f32 %v2359, %v2874
      %v3152 = vadd.f32 %v2360, %v2879
      %v3153 = vadd.f32 %v2361, %v2884
      %v3154 = vadd.f32 %v2362, %v2889
      %v3155 = vadd.f32 %v2363, %v2894
      %v3156 = vadd.f32 %v2364, %v2899
      %v3157 = vadd.f32 %v2365, %v2904
      %v3158 = vadd.f32 %v2366, %v2909
      %v3159 = vadd.f32 %v2367, %v2914
      %v3160 = vadd.f32 %v2368, %v2919
      %v3161 = vadd.f32 %v2369, %v2924
      %v3162 = vadd.f32 %v2370, %v2929
      %v3163 = vadd.f32 %v2371, %v2934
      %v3164 = vadd.f32 %v2372, %v2939
      %v3165 = vadd.f32 %v2373, %v2944
      %v3166 = vadd.f32 %v2374, %v2949
      %v3167 = vadd.f32 %v2375, %v2954
      %v3168 = vadd.f32 %v2376, %v2959
      %v3169 = vadd.f32 %v2377, %v2964
      %v3170 = vadd.f32 %v2378, %v2969
      %v3171 = vadd.f32 %v2379, %v2974
      %v3172 = vadd.f32 %v2380, %v2979
      %v3173 = vadd.f32 %v2381, %v2984
      %v3174 = vadd.f32 %v2382, %v2989
      %v3175 = vadd.f32 %v2383, %v2994
      %v3176 = vadd.f32 %v2384, %v2999
      %v3177 = vadd.f32 %v2385, %v3004
      %v3178 = vadd.f32 %v2386, %v3009
      %v3179 = vadd.f32 %v2387, %v3014
      %v3180 = vadd.f32 %v2388, %v3019
      %v3181 = vadd.f32 %v2389, %v3024
      %v3182 = vadd.f32 %v2390, %v3029
      %v3183 = vadd.f32 %v2391, %v3034
      %v3184 = vadd.f32 %v2392, %v3039
      %v3185 = vadd.f32 %v2393, %v3044
      %v3186 = vadd.f32 %v2394, %v3049
      %v3187 = vadd.f32 %v2395, %v3054
      %3188 = vst.msk [vmem:[%s201] sm:$0xff] %vm334, %v3056
      %3189 = vst.msk [vmem:[%s201 + $0x8] sm:$0xff] %vm334, %v3057
      %3190 = vst.msk [vmem:[%s201 + $0x10] sm:$0xff] %vm334, %v3058
      %3191 = vst.msk [vmem:[%s201 + $0x18] sm:$0xff] %vm334, %v3059
      %3192 = vst.msk [vmem:[%s201 + $0x20] sm:$0xff] %vm334, %v3060
      %3193 = vst.msk [vmem:[%s201 + $0x28] sm:$0xff] %vm334, %v3061
      %3194 = vst.msk [vmem:[%s201 + $0x30] sm:$0xff] %vm334, %v3062
      %3195 = vst.msk [vmem:[%s201 + $0x38] sm:$0xff] %vm334, %v3063
      %3196 = vst.msk [vmem:[%s201 + $0x40] sm:$0xff] %vm334, %v3064
      %3197 = vst.msk [vmem:[%s201 + $0x48] sm:$0xff] %vm334, %v3065
      %3198 = vst.msk [vmem:[%s201 + $0x50] sm:$0xff] %vm334, %v3066
      %3199 = vst.msk [vmem:[%s201 + $0x58] sm:$0xff] %vm334, %v3067
      %3200 = vst.msk [vmem:[%s201 + $0x60] sm:$0xff] %vm334, %v3068
      %3201 = vst.msk [vmem:[%s201 + $0x68] sm:$0xff] %vm334, %v3069
      %3202 = vst.msk [vmem:[%s201 + $0x70] sm:$0xff] %vm334, %v3070
      %3203 = vst.msk [vmem:[%s201 + $0x78] sm:$0xff] %vm334, %v3071
      %3204 = vst.msk [vmem:[%s201 + $0x80] sm:$0xff] %vm334, %v3072
      %3205 = vst.msk [vmem:[%s201 + $0x88] sm:$0xff] %vm334, %v3073
      %3206 = vst.msk [vmem:[%s201 + $0x90] sm:$0xff] %vm334, %v3074
      %3207 = vst.msk [vmem:[%s201 + $0x98] sm:$0xff] %vm334, %v3075
      %3208 = vst.msk [vmem:[%s201 + $0xa0] sm:$0xff] %vm334, %v3076
      %3209 = vst.msk [vmem:[%s201 + $0xa8] sm:$0xff] %vm334, %v3077
      %3210 = vst.msk [vmem:[%s201 + $0xb0] sm:$0xff] %vm334, %v3078
      %3211 = vst.msk [vmem:[%s201 + $0xb8] sm:$0xff] %vm334, %v3079
      %3212 = vst.msk [vmem:[%s201 + $0xc0] sm:$0xff] %vm334, %v3080
      %3213 = vst.msk [vmem:[%s201 + $0xc8] sm:$0xff] %vm334, %v3081
      %3214 = vst.msk [vmem:[%s201 + $0xd0] sm:$0xff] %vm334, %v3082
      %3215 = vst.msk [vmem:[%s201 + $0xd8] sm:$0xff] %vm334, %v3083
      %3216 = vst.msk [vmem:[%s201 + $0xe0] sm:$0xff] %vm334, %v3084
      %3217 = vst.msk [vmem:[%s201 + $0xe8] sm:$0xff] %vm334, %v3085
      %3218 = vst.msk [vmem:[%s201 + $0xf0] sm:$0xff] %vm334, %v3086
      %3219 = vst.msk [vmem:[%s201 + $0xf8] sm:$0xff] %vm334, %v3087
      %3220 = vst.msk [vmem:[%s201 + $0x100] sm:$0x1] %vm559, %v3088
      %3221 = vst.msk [vmem:[%s201 + $0x108] sm:$0xff] %vm334, %v3089
      %3222 = vst.msk [vmem:[%s201 + $0x110] sm:$0xff] %vm334, %v3090
      %3223 = vst.msk [vmem:[%s201 + $0x118] sm:$0xff] %vm334, %v3091
      %3224 = vst.msk [vmem:[%s201 + $0x120] sm:$0xff] %vm334, %v3092
      %3225 = vst.msk [vmem:[%s201 + $0x128] sm:$0xff] %vm334, %v3093
      %3226 = vst.msk [vmem:[%s201 + $0x130] sm:$0xff] %vm334, %v3094
      %3227 = vst.msk [vmem:[%s201 + $0x138] sm:$0xff] %vm334, %v3095
      %3228 = vst.msk [vmem:[%s201 + $0x140] sm:$0xff] %vm334, %v3096
      %3229 = vst.msk [vmem:[%s201 + $0x148] sm:$0xff] %vm334, %v3097
      %3230 = vst.msk [vmem:[%s201 + $0x150] sm:$0xff] %vm334, %v3098
      %3231 = vst.msk [vmem:[%s201 + $0x158] sm:$0xff] %vm334, %v3099
      %3232 = vst.msk [vmem:[%s201 + $0x160] sm:$0xff] %vm334, %v3100
      %3233 = vst.msk [vmem:[%s201 + $0x168] sm:$0xff] %vm334, %v3101
      %3234 = vst.msk [vmem:[%s201 + $0x170] sm:$0xff] %vm334, %v3102
      %3235 = vst.msk [vmem:[%s201 + $0x178] sm:$0xff] %vm334, %v3103
      %3236 = vst.msk [vmem:[%s201 + $0x180] sm:$0xff] %vm334, %v3104
      %3237 = vst.msk [vmem:[%s201 + $0x188] sm:$0xff] %vm334, %v3105
      %3238 = vst.msk [vmem:[%s201 + $0x190] sm:$0xff] %vm334, %v3106
      %3239 = vst.msk [vmem:[%s201 + $0x198] sm:$0xff] %vm334, %v3107
      %3240 = vst.msk [vmem:[%s201 + $0x1a0] sm:$0xff] %vm334, %v3108
      %3241 = vst.msk [vmem:[%s201 + $0x1a8] sm:$0xff] %vm334, %v3109
      %3242 = vst.msk [vmem:[%s201 + $0x1b0] sm:$0xff] %vm334, %v3110
      %3243 = vst.msk [vmem:[%s201 + $0x1b8] sm:$0xff] %vm334, %v3111
      %3244 = vst.msk [vmem:[%s201 + $0x1c0] sm:$0xff] %vm334, %v3112
      %3245 = vst.msk [vmem:[%s201 + $0x1c8] sm:$0xff] %vm334, %v3113
      %3246 = vst.msk [vmem:[%s201 + $0x1d0] sm:$0xff] %vm334, %v3114
      %3247 = vst.msk [vmem:[%s201 + $0x1d8] sm:$0xff] %vm334, %v3115
      %3248 = vst.msk [vmem:[%s201 + $0x1e0] sm:$0xff] %vm334, %v3116
      %3249 = vst.msk [vmem:[%s201 + $0x1e8] sm:$0xff] %vm334, %v3117
      %3250 = vst.msk [vmem:[%s201 + $0x1f0] sm:$0xff] %vm334, %v3118
      %3251 = vst.msk [vmem:[%s201 + $0x1f8] sm:$0xff] %vm334, %v3119
      %3252 = vst.msk [vmem:[%s201 + $0x200] sm:$0xff] %vm334, %v3120
      %3253 = vst.msk [vmem:[%s201 + $0x208] sm:$0x1] %vm559, %v3121
      %3254 = vst.msk [vmem:[%s201 + $0x210] sm:$0xff] %vm334, %v3122
      %3255 = vst.msk [vmem:[%s201 + $0x218] sm:$0xff] %vm334, %v3123
      %3256 = vst.msk [vmem:[%s201 + $0x220] sm:$0xff] %vm334, %v3124
      %3257 = vst.msk [vmem:[%s201 + $0x228] sm:$0xff] %vm334, %v3125
      %3258 = vst.msk [vmem:[%s201 + $0x230] sm:$0xff] %vm334, %v3126
      %3259 = vst.msk [vmem:[%s201 + $0x238] sm:$0xff] %vm334, %v3127
      %3260 = vst.msk [vmem:[%s201 + $0x240] sm:$0xff] %vm334, %v3128
      %3261 = vst.msk [vmem:[%s201 + $0x248] sm:$0xff] %vm334, %v3129
      %3262 = vst.msk [vmem:[%s201 + $0x250] sm:$0xff] %vm334, %v3130
      %3263 = vst.msk [vmem:[%s201 + $0x258] sm:$0xff] %vm334, %v3131
      %3264 = vst.msk [vmem:[%s201 + $0x260] sm:$0xff] %vm334, %v3132
      %3265 = vst.msk [vmem:[%s201 + $0x268] sm:$0xff] %vm334, %v3133
      %3266 = vst.msk [vmem:[%s201 + $0x270] sm:$0xff] %vm334, %v3134
      %3267 = vst.msk [vmem:[%s201 + $0x278] sm:$0xff] %vm334, %v3135
      %3268 = vst.msk [vmem:[%s201 + $0x280] sm:$0xff] %vm334, %v3136
      %3269 = vst.msk [vmem:[%s201 + $0x288] sm:$0xff] %vm334, %v3137
      %3270 = vst.msk [vmem:[%s201 + $0x290] sm:$0xff] %vm334, %v3138
      %3271 = vst.msk [vmem:[%s201 + $0x298] sm:$0xff] %vm334, %v3139
      %3272 = vst.msk [vmem:[%s201 + $0x2a0] sm:$0xff] %vm334, %v3140
      %3273 = vst.msk [vmem:[%s201 + $0x2a8] sm:$0xff] %vm334, %v3141
      %3274 = vst.msk [vmem:[%s201 + $0x2b0] sm:$0xff] %vm334, %v3142
      %3275 = vst.msk [vmem:[%s201 + $0x2b8] sm:$0xff] %vm334, %v3143
      %3276 = vst.msk [vmem:[%s201 + $0x2c0] sm:$0xff] %vm334, %v3144
      %3277 = vst.msk [vmem:[%s201 + $0x2c8] sm:$0xff] %vm334, %v3145
      %3278 = vst.msk [vmem:[%s201 + $0x2d0] sm:$0xff] %vm334, %v3146
      %3279 = vst.msk [vmem:[%s201 + $0x2d8] sm:$0xff] %vm334, %v3147
      %3280 = vst.msk [vmem:[%s201 + $0x2e0] sm:$0xff] %vm334, %v3148
      %3281 = vst.msk [vmem:[%s201 + $0x2e8] sm:$0xff] %vm334, %v3149
      %3282 = vst.msk [vmem:[%s201 + $0x2f0] sm:$0xff] %vm334, %v3150
      %3283 = vst.msk [vmem:[%s201 + $0x2f8] sm:$0xff] %vm334, %v3151
      %3284 = vst.msk [vmem:[%s201 + $0x300] sm:$0xff] %vm334, %v3152
      %3285 = vst.msk [vmem:[%s201 + $0x308] sm:$0xff] %vm334, %v3153
      %3286 = vst.msk [vmem:[%s201 + $0x310] sm:$0x1] %vm559, %v3154
      %3287 = vst.msk [vmem:[%s201 + $0x318] sm:$0xff] %vm334, %v3155
      %3288 = vst.msk [vmem:[%s201 + $0x320] sm:$0xff] %vm334, %v3156
      %3289 = vst.msk [vmem:[%s201 + $0x328] sm:$0xff] %vm334, %v3157
      %3290 = vst.msk [vmem:[%s201 + $0x330] sm:$0xff] %vm334, %v3158
      %3291 = vst.msk [vmem:[%s201 + $0x338] sm:$0xff] %vm334, %v3159
      %3292 = vst.msk [vmem:[%s201 + $0x340] sm:$0xff] %vm334, %v3160
      %3293 = vst.msk [vmem:[%s201 + $0x348] sm:$0xff] %vm334, %v3161
      %3294 = vst.msk [vmem:[%s201 + $0x350] sm:$0xff] %vm334, %v3162
      %3295 = vst.msk [vmem:[%s201 + $0x358] sm:$0xff] %vm334, %v3163
      %3296 = vst.msk [vmem:[%s201 + $0x360] sm:$0xff] %vm334, %v3164
      %3297 = vst.msk [vmem:[%s201 + $0x368] sm:$0xff] %vm334, %v3165
      %3298 = vst.msk [vmem:[%s201 + $0x370] sm:$0xff] %vm334, %v3166
      %3299 = vst.msk [vmem:[%s201 + $0x378] sm:$0xff] %vm334, %v3167
      %3300 = vst.msk [vmem:[%s201 + $0x380] sm:$0xff] %vm334, %v3168
      %3301 = vst.msk [vmem:[%s201 + $0x388] sm:$0xff] %vm334, %v3169
      %3302 = vst.msk [vmem:[%s201 + $0x390] sm:$0xff] %vm334, %v3170
      %3303 = vst.msk [vmem:[%s201 + $0x398] sm:$0xff] %vm334, %v3171
      %3304 = vst.msk [vmem:[%s201 + $0x3a0] sm:$0xff] %vm334, %v3172
      %3305 = vst.msk [vmem:[%s201 + $0x3a8] sm:$0xff] %vm334, %v3173
      %3306 = vst.msk [vmem:[%s201 + $0x3b0] sm:$0xff] %vm334, %v3174
      %3307 = vst.msk [vmem:[%s201 + $0x3b8] sm:$0xff] %vm334, %v3175
      %3308 = vst.msk [vmem:[%s201 + $0x3c0] sm:$0xff] %vm334, %v3176
      %3309 = vst.msk [vmem:[%s201 + $0x3c8] sm:$0xff] %vm334, %v3177
      %3310 = vst.msk [vmem:[%s201 + $0x3d0] sm:$0xff] %vm334, %v3178
      %3311 = vst.msk [vmem:[%s201 + $0x3d8] sm:$0xff] %vm334, %v3179
      %3312 = vst.msk [vmem:[%s201 + $0x3e0] sm:$0xff] %vm334, %v3180
      %3313 = vst.msk [vmem:[%s201 + $0x3e8] sm:$0xff] %vm334, %v3181
      %3314 = vst.msk [vmem:[%s201 + $0x3f0] sm:$0xff] %vm334, %v3182
      %3315 = vst.msk [vmem:[%s201 + $0x3f8] sm:$0xff] %vm334, %v3183
      %3316 = vst.msk [vmem:[%s201 + $0x400] sm:$0xff] %vm334, %v3184
      %3317 = vst.msk [vmem:[%s201 + $0x408] sm:$0xff] %vm334, %v3185
      %3318 = vst.msk [vmem:[%s201 + $0x410] sm:$0xff] %vm334, %v3186
      %3319 = vst.msk [vmem:[%s201 + $0x418] sm:$0x1] %vm559, %v3187
      %p3320 = scmp.lt.s32.totalorder %s18, 1
      %s3321 = scalar_select %p3320, %s18, 1
      %p3322 = scmp.lt.s32.totalorder %s19, 0
      %s3323 = scalar_select %p3322, %s19, 0
      %s3324 = smul.addr %s3321, 132
      %s3325 = sadd.s32 %s3323, %s3324
      %s3326 = smul.addr %s3325, 8
      %s3327 = scalar_lea.vmem %s3, %s3326
      // Predicated region
      $region33: #{layer_norm.1} parent=31 // pred_check
        %p3328 = pneg %p116
      $region34: #{layer_norm.1} parent=31 // pred_check_branch
        %3330 = sbr.rel (%p3328) target = $region36
      $region35: #{layer_norm.1} parent=31 // pred_region
        _
      $region36: #{layer_norm.1} parent=31 // pred_fallthru
        _
    $region32: #{layer_norm.1} parent=5 // pred_fallthru
      _
    %p3331 = scmp.le.s32.totalorder 2, %s9
    // Predicated region
    $region37: #{layer_norm.1} parent=5 // pred_check
      %p3332 = pneg %p3331
    $region38: #{layer_norm.1} parent=5 // pred_check_branch
      %3334 = sbr.rel (%p3332) target = $region40
    $region39: #{layer_norm.1} parent=5 // pred_region
      %s3335 = ssub.s32 %s9, 2
      // Predicated region
      $region41: #{layer_norm.1} parent=39 // pred_check
        %p3336 = pneg %p122
      $region42: #{layer_norm.1} parent=39 // pred_check_branch
        %3338 = sbr.rel (%p3336) target = $region44
      $region43: #{layer_norm.1} parent=39 // pred_region
        %p3339 = scmp.lt.s32.totalorder %s20, 1
        %s3340 = scalar_select %p3339, %s20, 1
        %p3341 = scmp.lt.s32.totalorder %s21, 0
        %s3342 = scalar_select %p3341, %s21, 0
        %s3343 = smul.addr %s3340, 132
        %s3344 = sadd.s32 %s3342, %s3343
        %s3345 = smul.addr %s3344, 8
        %s3346 = scalar_lea.vmem %s3, %s3345
      $region44: #{layer_norm.1} parent=39 // pred_fallthru
        _
    $region40: #{layer_norm.1} parent=5 // pred_fallthru
      _
  $region6: #{layer_norm.1} parent=0 // loop_footer
    %s13 = sadd.s32 1, %s9
  $region7: #{layer_norm.1} parent=0 // loop_footer_branch
    %8 = sbr.rel target = $region3
  $region8: #{layer_norm.1} parent=0 // loop_exit
    _

</llo_original>
